<compile_context>
chip_gen: v7x
topology: tpu7x:2x2x1
jax: 0.10.0
libtpu: 0.0.40
codegen_flags: <defaults>
</compile_context>

<pallas_src>
import math

import jax
import jax.numpy as jnp
from jax.experimental import pallas as pl
from jax.experimental.pallas import tpu as pltpu

# ---- small, deterministic model config ----
S = 8          # seq_len
B = 2          # batch
D = 32         # d_model
H = 4          # n_heads
DH = D // H    # head dim
DFF = 64       # d_ff
V = 64         # vocab_size
NLAYERS = 2    # n_layers
LN_EPS = 1e-5
BS = B * S     # flattened tokens (row r = s*B + b, S-major)
LMP = 128      # lane-dense padded lm_head width (multiple of 128, >= V)


def _layer_norm(x, g, b):
    mu = jnp.mean(x, axis=-1, keepdims=True)
    var = jnp.mean((x - mu) ** 2, axis=-1, keepdims=True)
    return (x - mu) * jax.lax.rsqrt(var + LN_EPS) * g + b


def _gelu_exact(x):
    # torch.nn.GELU() default = exact erf-based GELU
    return 0.5 * x * (1.0 + jax.lax.erf(x * (1.0 / math.sqrt(2.0))))


# --------------------------------------------------------------------------
# Single fused kernel: one-hot embedding matmul + PE + NLAYERS transformer
# blocks + lm_head.  grid=(1,): whole batch in one block, weights VMEM-resident.
# --------------------------------------------------------------------------
def fused_lm_kernel(ids_ref,                    # (BS, 1) int32
                    emb_ref,                    # (V, D)   bf16
                    pe_ref,                     # (BS, D)  f32 (S-major)
                    bias_ref,                   # (BS, BS) f32 additive mask
                    wqkv_ref, bqkv_ref,         # (L, D, 3D) bf16, (L, 1, 3D) f32
                    wo_ref,                     # (L, D, D)  bf16
                    w1_ref, b1_ref,             # (L, D, DFF) bf16, (L, 1, DFF) f32
                    w2_ref,                     # (L, DFF, D) bf16
                    dvec_ref,                   # (L, 6, D) f32: bo,ln1g,ln1b,ln2g,ln2b,b2
                    lmh_ref,                    # (D, LMP)  bf16 padded lm_head
                    o_ref):                     # (BS, LMP) f32 logits (lane-dense)
    bf16 = jnp.bfloat16

    # ---- token embedding as a one-hot matmul (replaces 16 scalar copies) ----
    ids = ids_ref[...]                                          # (BS, 1) int32
    vocab_iota = jax.lax.broadcasted_iota(jnp.int32, (BS, V), 1)
    onehot = jnp.where(vocab_iota == ids, 1.0, 0.0).astype(bf16)   # (BS, V)
    x = jnp.dot(onehot, emb_ref[...],
                preferred_element_type=jnp.float32) + pe_ref[...]  # (BS, D) f32

    # additive mask: 0 where (same batch AND key_pos <= query_pos), else -1e30
    attn_bias = bias_ref[...]                                    # (BS, BS) f32

    # ---- transformer layers (unrolled) ----
    for l in range(NLAYERS):
        wqkv = wqkv_ref[l]                                       # (D, 3D) bf16
        bqkv = bqkv_ref[l]                                       # (1, 3D) f32
        wo = wo_ref[l]                                           # (D, D)  bf16
        w1 = w1_ref[l]                                           # (D, DFF) bf16
        b1 = b1_ref[l]                                           # (1, DFF) f32
        w2 = w2_ref[l]                                           # (DFF, D) bf16
        dv = dvec_ref[l]                                         # (6, D) f32
        bo, ln1g, ln1b = dv[0:1], dv[1:2], dv[2:3]
        ln2g, ln2b, b2 = dv[3:4], dv[4:5], dv[5:6]

        # fused QKV projection (1/sqrt(DH) already folded into the Q columns)
        qkv = jnp.dot(x.astype(bf16), wqkv,
                      preferred_element_type=jnp.float32) + bqkv  # (BS, 3D) f32

        # causal multi-head attention on flat (BS, BS) score matrices:
        # no (B,S,D) reshapes/transposes; one score + one PV dot per head.
        heads = []
        for h in range(H):
            lo, hi = h * DH, (h + 1) * DH
            qh = qkv[:, lo:hi].astype(bf16)                       # (BS, DH)
            kh = qkv[:, D + lo:D + hi].astype(bf16)               # (BS, DH)
            vh = qkv[:, 2 * D + lo:2 * D + hi].astype(bf16)       # (BS, DH)
            sc = jax.lax.dot_general(qh, kh, (((1,), (1,)), ((), ())),
                                     preferred_element_type=jnp.float32)
            sc = sc + attn_bias                                   # (BS, BS)
            m = jnp.max(sc, axis=-1, keepdims=True)
            e = jnp.exp(sc - m)
            p = e * pl.reciprocal(jnp.sum(e, axis=-1, keepdims=True), approx=True)
            heads.append(jnp.dot(p.astype(bf16), vh,
                                 preferred_element_type=jnp.float32))  # (BS, DH)
        attn = jnp.concatenate(heads, axis=-1)                    # (BS, D)
        attn = jnp.dot(attn.astype(bf16), wo,
                       preferred_element_type=jnp.float32) + bo   # single wo dot

        # residual + post-LayerNorm, then FFN (dropout = identity)
        x1 = _layer_norm(x + attn, ln1g, ln1b)
        hmid = _gelu_exact(jnp.dot(x1.astype(bf16), w1,
                                   preferred_element_type=jnp.float32) + b1)
        ff = jnp.dot(hmid.astype(bf16), w2,
                     preferred_element_type=jnp.float32) + b2
        x = _layer_norm(x1 + ff, ln2g, ln2b)

    # ---- lm_head (padded to 128 lanes -> lane-dense store) ----
    o_ref[...] = jnp.dot(x.astype(bf16), lmh_ref[...],
                         preferred_element_type=jnp.float32).astype(o_ref.dtype)


def _full_spec(shape):
    n = len(shape)
    return pl.BlockSpec(shape, lambda *_, _n=n: (0,) * _n)


@jax.jit
def osu_transformer_lm_forward(input_ids, params):
    """input_ids: (S, B) int32 -> {'logits': (S, B, V) float32}."""
    # S-major flat token order: row r = s*B + b (plain row-major flatten).
    ids_col = input_ids.astype(jnp.int32).reshape(BS, 1)
    in_arrays = (ids_col, params["emb"], params["pe_flat"], params["attn_bias"],
                 params["wqkv"], params["bqkv"], params["wo"], params["w1"],
                 params["b1"], params["w2"], params["dvecs"],
                 params["lm_head_padded"])
    grid_spec = pltpu.PrefetchScalarGridSpec(
        num_scalar_prefetch=0,
        grid=(1,),
        in_specs=[_full_spec(a.shape) for a in in_arrays],
        out_specs=_full_spec((BS, LMP)),
        scratch_shapes=[],
    )
    logits_flat = pl.pallas_call(
        fused_lm_kernel,
        out_shape=jax.ShapeDtypeStruct((BS, LMP), jnp.float32),
        grid_spec=grid_spec,
        compiler_params=pltpu.CompilerParams(
            dimension_semantics=("arbitrary",)),
    )(*in_arrays)
    # S-major rows -> restoring (S, B, V) is just a slice + free reshape.
    logits = logits_flat[:, :V].reshape(S, B, V)
    # TODO(synk): optional `labels` cross-entropy loss branch not implemented
    # (forward is called with labels=None here).
    return {"logits": logits}


# --------------------------------------------------------------------------
# Parameter init (deterministic; matches _init_weights: normal(0, 0.02) for
# linear/embedding weights, zeros bias, ones/zeros LayerNorm).  Linear weights
# are stored pre-transposed as (in, out) in bf16; QKV fused with the attention
# scale folded into the Q columns; params stacked per layer; lm_head padded to
# 128 lanes; PE precomputed S-major; causal+batch mask bias precomputed.
# --------------------------------------------------------------------------
def sinusoidal_pe(seq_len, d_model):
    pos = jnp.arange(seq_len, dtype=jnp.float32)[:, None]
    i = jnp.arange(0, d_model, 2, dtype=jnp.float32)
    div = jnp.exp(-math.log(10000.0) * i / d_model)
    pe = jnp.zeros((seq_len, d_model), jnp.float32)
    pe = pe.at[:, 0::2].set(jnp.sin(pos * div))
    pe = pe.at[:, 1::2].set(jnp.cos(pos * div))
    return pe


def init_params(key):
    def nrm(k, shape):
        return jax.random.normal(k, shape, jnp.float32) * 0.02

    n_needed = 1 + NLAYERS * 6 + 1
    keys = iter(jax.random.split(key, n_needed))
    scale = 1.0 / math.sqrt(DH)

    emb = nrm(next(keys), (V, D))
    wqkv, wo, w1, w2 = [], [], [], []
    for _ in range(NLAYERS):
        wq = nrm(next(keys), (D, D)) * scale      # fold 1/sqrt(DH) into Q proj
        wk = nrm(next(keys), (D, D))
        wv = nrm(next(keys), (D, D))
        wqkv.append(jnp.concatenate([wq, wk, wv], axis=1))      # (D, 3D)
        wo.append(nrm(next(keys), (D, D)))
        w1.append(nrm(next(keys), (D, DFF)))
        w2.append(nrm(next(keys), (DFF, D)))
    lm = nrm(next(keys), (D, V))                                # bias=False

    z = jnp.zeros((D,), jnp.float32)
    o = jnp.ones((D,), jnp.float32)
    dvec_layer = jnp.stack([z, o, z, o, z, z])    # bo,ln1g,ln1b,ln2g,ln2b,b2

    # S-major PE: row r = s*B + b gets pe[s]
    pe_flat = jnp.repeat(sinusoidal_pe(S, D), B, axis=0)        # (BS, D)

    # additive attention mask for flat S-major rows:
    #   valid(r, p) <=> same batch element AND key_seq_pos <= query_seq_pos
    s_idx = jnp.arange(BS, dtype=jnp.int32) // B
    b_idx = jnp.arange(BS, dtype=jnp.int32) % B
    valid = (b_idx[:, None] == b_idx[None, :]) & (s_idx[None, :] <= s_idx[:, None])
    attn_bias = jnp.where(valid, 0.0, -1e30).astype(jnp.float32)  # (BS, BS)

    lm_padded = jnp.zeros((D, LMP), jnp.float32).at[:, :V].set(lm)

    bf16 = jnp.bfloat16
    return {
        "emb": emb.astype(bf16),                                # (V, D)
        "pe_flat": pe_flat,                                     # (BS, D) f32
        "attn_bias": attn_bias,                                 # (BS, BS) f32
        "wqkv": jnp.stack(wqkv).astype(bf16),                   # (L, D, 3D)
        "bqkv": jnp.zeros((NLAYERS, 1, 3 * D), jnp.float32),
        "wo": jnp.stack(wo).astype(bf16),                       # (L, D, D)
        "w1": jnp.stack(w1).astype(bf16),                       # (L, D, DFF)
        "b1": jnp.zeros((NLAYERS, 1, DFF), jnp.float32),
        "w2": jnp.stack(w2).astype(bf16),                       # (L, DFF, D)
        "dvecs": jnp.tile(dvec_layer[None], (NLAYERS, 1, 1)),   # (L, 6, D) f32
        "lm_head_padded": lm_padded.astype(bf16),               # (D, LMP)
    }


if __name__ == "__main__":
    key = jax.random.PRNGKey(0)
    k_params, k_ids = jax.random.split(key)
    params = init_params(k_params)
    input_ids = jax.random.randint(k_ids, (S, B), 0, V, dtype=jnp.int32)

    out = osu_transformer_lm_forward(input_ids, params)
    jax.block_until_ready(out["logits"])
    assert out["logits"].shape == (S, B, V)
    assert bool(jnp.all(jnp.isfinite(out["logits"])))
    print("KERNEL_OK")
</pallas_src>

<mosaic_0001>
module attributes {stable_mosaic.version = 11 : i64} {
  func.func @fused_lm_kernel(%arg0: i32, %arg1: memref<16x1xi32, #tpu.memory_space<vmem>>, %arg2: memref<64x32xbf16, #tpu.memory_space<vmem>>, %arg3: memref<16x32xf32, #tpu.memory_space<vmem>>, %arg4: memref<16x16xf32, #tpu.memory_space<vmem>>, %arg5: memref<2x32x96xbf16, #tpu.memory_space<vmem>>, %arg6: memref<2x1x96xf32, #tpu.memory_space<vmem>>, %arg7: memref<2x32x32xbf16, #tpu.memory_space<vmem>>, %arg8: memref<2x32x64xbf16, #tpu.memory_space<vmem>>, %arg9: memref<2x1x64xf32, #tpu.memory_space<vmem>>, %arg10: memref<2x64x32xbf16, #tpu.memory_space<vmem>>, %arg11: memref<2x6x32xf32, #tpu.memory_space<vmem>>, %arg12: memref<32x128xbf16, #tpu.memory_space<vmem>>, %arg13: memref<16x128xf32, #tpu.memory_space<vmem>>) attributes {dimension_semantics = [#tpu.dimension_semantics<arbitrary>], iteration_bounds = array<i64: 1>, scalar_prefetch = 0 : i64, scratch_operands = 0 : i64, tpu.core_type = #tpu.core_type<tc>, window_params = [{pipeline_mode = #tpu.pipeline_mode<synchronous>, transform_indices = @transform_0, window_bounds = array<i64: 16, 1>}, {pipeline_mode = #tpu.pipeline_mode<synchronous>, transform_indices = @transform_1, window_bounds = array<i64: 64, 32>}, {pipeline_mode = #tpu.pipeline_mode<synchronous>, transform_indices = @transform_2, window_bounds = array<i64: 16, 32>}, {pipeline_mode = #tpu.pipeline_mode<synchronous>, transform_indices = @transform_3, window_bounds = array<i64: 16, 16>}, {pipeline_mode = #tpu.pipeline_mode<synchronous>, transform_indices = @transform_4, window_bounds = array<i64: 2, 32, 96>}, {pipeline_mode = #tpu.pipeline_mode<synchronous>, transform_indices = @transform_5, window_bounds = array<i64: 2, 1, 96>}, {pipeline_mode = #tpu.pipeline_mode<synchronous>, transform_indices = @transform_6, window_bounds = array<i64: 2, 32, 32>}, {pipeline_mode = #tpu.pipeline_mode<synchronous>, transform_indices = @transform_7, window_bounds = array<i64: 2, 32, 64>}, {pipeline_mode = #tpu.pipeline_mode<synchronous>, transform_indices = @transform_8, window_bounds = array<i64: 2, 1, 64>}, {pipeline_mode = #tpu.pipeline_mode<synchronous>, transform_indices = @transform_9, window_bounds = array<i64: 2, 64, 32>}, {pipeline_mode = #tpu.pipeline_mode<synchronous>, transform_indices = @transform_10, window_bounds = array<i64: 2, 6, 32>}, {pipeline_mode = #tpu.pipeline_mode<synchronous>, transform_indices = @transform_11, window_bounds = array<i64: 32, 128>}, {pipeline_mode = #tpu.pipeline_mode<synchronous>, transform_indices = @transform_12, window_bounds = array<i64: 16, 128>}]} {
    %c0 = arith.constant 0 : index
    %c0_0 = arith.constant 0 : index
    %0 = vector.load %arg1[%c0, %c0_0] : memref<16x1xi32, #tpu.memory_space<vmem>>, vector<16x1xi32>
    %1 = tpu.iota {dimensions = array<i32: 1>} : vector<16x64xi32>
    %2 = vector.broadcast %0 : vector<16x1xi32> to vector<16x64xi32>
    %3 = arith.cmpi eq, %1, %2 : vector<16x64xi32>
    %cst = arith.constant 1.000000e+00 : f32
    %cst_1 = arith.constant 0.000000e+00 : f32
    %4 = vector.broadcast %cst : f32 to vector<16x64xf32>
    %5 = vector.broadcast %cst_1 : f32 to vector<16x64xf32>
    %6 = arith.select %3, %4, %5 : vector<16x64xi1>, vector<16x64xf32>
    %7 = arith.truncf %6 : vector<16x64xf32> to vector<16x64xbf16>
    %c0_2 = arith.constant 0 : index
    %c0_3 = arith.constant 0 : index
    %8 = vector.load %arg2[%c0_2, %c0_3] : memref<64x32xbf16, #tpu.memory_space<vmem>>, vector<64x32xbf16>
    %cst_4 = arith.constant dense<0.000000e+00> : vector<16x32xf32>
    %9 = tpu.matmul %7, %8, %cst_4 {dimension_numbers = #tpu.dot_dimension_numbers<[1], [0], [0], [1], [0, 0, 1, 1], [], []>} : vector<16x64xbf16>, vector<64x32xbf16>, vector<16x32xf32> -> vector<16x32xf32>
    %c0_5 = arith.constant 0 : index
    %c0_6 = arith.constant 0 : index
    %10 = vector.load %arg3[%c0_5, %c0_6] : memref<16x32xf32, #tpu.memory_space<vmem>>, vector<16x32xf32>
    %11 = arith.addf %9, %10 : vector<16x32xf32>
    %c0_7 = arith.constant 0 : index
    %c0_8 = arith.constant 0 : index
    %12 = vector.load %arg4[%c0_7, %c0_8] : memref<16x16xf32, #tpu.memory_space<vmem>>, vector<16x16xf32>
    %c0_9 = arith.constant 0 : index
    %c0_10 = arith.constant 0 : index
    %c0_11 = arith.constant 0 : index
    %13 = vector.load %arg5[%c0_9, %c0_10, %c0_11] : memref<2x32x96xbf16, #tpu.memory_space<vmem>>, vector<1x32x96xbf16>
    %14 = vector.shape_cast %13 : vector<1x32x96xbf16> to vector<32x96xbf16>
    %c0_12 = arith.constant 0 : index
    %c0_13 = arith.constant 0 : index
    %c0_14 = arith.constant 0 : index
    %15 = vector.load %arg6[%c0_12, %c0_13, %c0_14] : memref<2x1x96xf32, #tpu.memory_space<vmem>>, vector<1x1x96xf32>
    %16 = vector.shape_cast %15 : vector<1x1x96xf32> to vector<1x96xf32>
    %c0_15 = arith.constant 0 : index
    %c0_16 = arith.constant 0 : index
    %c0_17 = arith.constant 0 : index
    %17 = vector.load %arg7[%c0_15, %c0_16, %c0_17] : memref<2x32x32xbf16, #tpu.memory_space<vmem>>, vector<1x32x32xbf16>
    %18 = vector.shape_cast %17 : vector<1x32x32xbf16> to vector<32x32xbf16>
    %c0_18 = arith.constant 0 : index
    %c0_19 = arith.constant 0 : index
    %c0_20 = arith.constant 0 : index
    %19 = vector.load %arg8[%c0_18, %c0_19, %c0_20] : memref<2x32x64xbf16, #tpu.memory_space<vmem>>, vector<1x32x64xbf16>
    %20 = vector.shape_cast %19 : vector<1x32x64xbf16> to vector<32x64xbf16>
    %c0_21 = arith.constant 0 : index
    %c0_22 = arith.constant 0 : index
    %c0_23 = arith.constant 0 : index
    %21 = vector.load %arg9[%c0_21, %c0_22, %c0_23] : memref<2x1x64xf32, #tpu.memory_space<vmem>>, vector<1x1x64xf32>
    %22 = vector.shape_cast %21 : vector<1x1x64xf32> to vector<1x64xf32>
    %c0_24 = arith.constant 0 : index
    %c0_25 = arith.constant 0 : index
    %c0_26 = arith.constant 0 : index
    %23 = vector.load %arg10[%c0_24, %c0_25, %c0_26] : memref<2x64x32xbf16, #tpu.memory_space<vmem>>, vector<1x64x32xbf16>
    %24 = vector.shape_cast %23 : vector<1x64x32xbf16> to vector<64x32xbf16>
    %c0_27 = arith.constant 0 : index
    %c0_28 = arith.constant 0 : index
    %c0_29 = arith.constant 0 : index
    %25 = vector.load %arg11[%c0_27, %c0_28, %c0_29] : memref<2x6x32xf32, #tpu.memory_space<vmem>>, vector<1x6x32xf32>
    %26 = vector.shape_cast %25 : vector<1x6x32xf32> to vector<6x32xf32>
    %27 = vector.extract_strided_slice %26 {offsets = [0, 0], sizes = [1, 32], strides = [1, 1]} : vector<6x32xf32> to vector<1x32xf32>
    %28 = vector.extract_strided_slice %26 {offsets = [1, 0], sizes = [1, 32], strides = [1, 1]} : vector<6x32xf32> to vector<1x32xf32>
    %29 = vector.extract_strided_slice %26 {offsets = [2, 0], sizes = [1, 32], strides = [1, 1]} : vector<6x32xf32> to vector<1x32xf32>
    %30 = vector.extract_strided_slice %26 {offsets = [3, 0], sizes = [1, 32], strides = [1, 1]} : vector<6x32xf32> to vector<1x32xf32>
    %31 = vector.extract_strided_slice %26 {offsets = [4, 0], sizes = [1, 32], strides = [1, 1]} : vector<6x32xf32> to vector<1x32xf32>
    %32 = vector.extract_strided_slice %26 {offsets = [5, 0], sizes = [1, 32], strides = [1, 1]} : vector<6x32xf32> to vector<1x32xf32>
    %33 = arith.truncf %11 : vector<16x32xf32> to vector<16x32xbf16>
    %cst_30 = arith.constant dense<0.000000e+00> : vector<16x96xf32>
    %34 = tpu.matmul %33, %14, %cst_30 {dimension_numbers = #tpu.dot_dimension_numbers<[1], [0], [0], [1], [0, 0, 1, 1], [], []>} : vector<16x32xbf16>, vector<32x96xbf16>, vector<16x96xf32> -> vector<16x96xf32>
    %35 = vector.broadcast %16 : vector<1x96xf32> to vector<16x96xf32>
    %36 = arith.addf %34, %35 : vector<16x96xf32>
    %37 = vector.extract_strided_slice %36 {offsets = [0, 0], sizes = [16, 8], strides = [1, 1]} : vector<16x96xf32> to vector<16x8xf32>
    %38 = arith.truncf %37 : vector<16x8xf32> to vector<16x8xbf16>
    %39 = vector.extract_strided_slice %36 {offsets = [0, 32], sizes = [16, 8], strides = [1, 1]} : vector<16x96xf32> to vector<16x8xf32>
    %40 = arith.truncf %39 : vector<16x8xf32> to vector<16x8xbf16>
    %41 = vector.extract_strided_slice %36 {offsets = [0, 64], sizes = [16, 8], strides = [1, 1]} : vector<16x96xf32> to vector<16x8xf32>
    %42 = arith.truncf %41 : vector<16x8xf32> to vector<16x8xbf16>
    %cst_31 = arith.constant dense<0.000000e+00> : vector<16x16xf32>
    %43 = tpu.matmul %38, %40, %cst_31 {dimension_numbers = #tpu.dot_dimension_numbers<[1], [1], [0], [0], [0, 0, 1, 0], [], []>} : vector<16x8xbf16>, vector<16x8xbf16>, vector<16x16xf32> -> vector<16x16xf32>
    %44 = arith.addf %43, %12 : vector<16x16xf32>
    %cst_32 = arith.constant dense<0xFF800000> : vector<16xf32>
    %45 = vector.multi_reduction <maximumf>, %44, %cst_32 [1] : vector<16x16xf32> to vector<16xf32>
    %46 = vector.shape_cast %45 : vector<16xf32> to vector<16x1xf32>
    %47 = vector.broadcast %46 : vector<16x1xf32> to vector<16x16xf32>
    %48 = arith.subf %44, %47 : vector<16x16xf32>
    %49 = math.exp %48 : vector<16x16xf32>
    %cst_33 = arith.constant dense<0.000000e+00> : vector<16xf32>
    %50 = vector.multi_reduction <add>, %49, %cst_33 [1] : vector<16x16xf32> to vector<16xf32>
    %51 = vector.shape_cast %50 : vector<16xf32> to vector<16x1xf32>
    %52 = tpu.reciprocal %51 {approx = true} : vector<16x1xf32> -> vector<16x1xf32>
    %53 = vector.broadcast %52 : vector<16x1xf32> to vector<16x16xf32>
    %54 = arith.mulf %49, %53 : vector<16x16xf32>
    %55 = arith.truncf %54 : vector<16x16xf32> to vector<16x16xbf16>
    %cst_34 = arith.constant dense<0.000000e+00> : vector<16x8xf32>
    %56 = tpu.matmul %55, %42, %cst_34 {dimension_numbers = #tpu.dot_dimension_numbers<[1], [0], [0], [1], [0, 0, 1, 1], [], []>} : vector<16x16xbf16>, vector<16x8xbf16>, vector<16x8xf32> -> vector<16x8xf32>
    %57 = vector.extract_strided_slice %36 {offsets = [0, 8], sizes = [16, 8], strides = [1, 1]} : vector<16x96xf32> to vector<16x8xf32>
    %58 = arith.truncf %57 : vector<16x8xf32> to vector<16x8xbf16>
    %59 = vector.extract_strided_slice %36 {offsets = [0, 40], sizes = [16, 8], strides = [1, 1]} : vector<16x96xf32> to vector<16x8xf32>
    %60 = arith.truncf %59 : vector<16x8xf32> to vector<16x8xbf16>
    %61 = vector.extract_strided_slice %36 {offsets = [0, 72], sizes = [16, 8], strides = [1, 1]} : vector<16x96xf32> to vector<16x8xf32>
    %62 = arith.truncf %61 : vector<16x8xf32> to vector<16x8xbf16>
    %cst_35 = arith.constant dense<0.000000e+00> : vector<16x16xf32>
    %63 = tpu.matmul %58, %60, %cst_35 {dimension_numbers = #tpu.dot_dimension_numbers<[1], [1], [0], [0], [0, 0, 1, 0], [], []>} : vector<16x8xbf16>, vector<16x8xbf16>, vector<16x16xf32> -> vector<16x16xf32>
    %64 = arith.addf %63, %12 : vector<16x16xf32>
    %cst_36 = arith.constant dense<0xFF800000> : vector<16xf32>
    %65 = vector.multi_reduction <maximumf>, %64, %cst_36 [1] : vector<16x16xf32> to vector<16xf32>
    %66 = vector.shape_cast %65 : vector<16xf32> to vector<16x1xf32>
    %67 = vector.broadcast %66 : vector<16x1xf32> to vector<16x16xf32>
    %68 = arith.subf %64, %67 : vector<16x16xf32>
    %69 = math.exp %68 : vector<16x16xf32>
    %cst_37 = arith.constant dense<0.000000e+00> : vector<16xf32>
    %70 = vector.multi_reduction <add>, %69, %cst_37 [1] : vector<16x16xf32> to vector<16xf32>
    %71 = vector.shape_cast %70 : vector<16xf32> to vector<16x1xf32>
    %72 = tpu.reciprocal %71 {approx = true} : vector<16x1xf32> -> vector<16x1xf32>
    %73 = vector.broadcast %72 : vector<16x1xf32> to vector<16x16xf32>
    %74 = arith.mulf %69, %73 : vector<16x16xf32>
    %75 = arith.truncf %74 : vector<16x16xf32> to vector<16x16xbf16>
    %cst_38 = arith.constant dense<0.000000e+00> : vector<16x8xf32>
    %76 = tpu.matmul %75, %62, %cst_38 {dimension_numbers = #tpu.dot_dimension_numbers<[1], [0], [0], [1], [0, 0, 1, 1], [], []>} : vector<16x16xbf16>, vector<16x8xbf16>, vector<16x8xf32> -> vector<16x8xf32>
    %77 = vector.extract_strided_slice %36 {offsets = [0, 16], sizes = [16, 8], strides = [1, 1]} : vector<16x96xf32> to vector<16x8xf32>
    %78 = arith.truncf %77 : vector<16x8xf32> to vector<16x8xbf16>
    %79 = vector.extract_strided_slice %36 {offsets = [0, 48], sizes = [16, 8], strides = [1, 1]} : vector<16x96xf32> to vector<16x8xf32>
    %80 = arith.truncf %79 : vector<16x8xf32> to vector<16x8xbf16>
    %81 = vector.extract_strided_slice %36 {offsets = [0, 80], sizes = [16, 8], strides = [1, 1]} : vector<16x96xf32> to vector<16x8xf32>
    %82 = arith.truncf %81 : vector<16x8xf32> to vector<16x8xbf16>
    %cst_39 = arith.constant dense<0.000000e+00> : vector<16x16xf32>
    %83 = tpu.matmul %78, %80, %cst_39 {dimension_numbers = #tpu.dot_dimension_numbers<[1], [1], [0], [0], [0, 0, 1, 0], [], []>} : vector<16x8xbf16>, vector<16x8xbf16>, vector<16x16xf32> -> vector<16x16xf32>
    %84 = arith.addf %83, %12 : vector<16x16xf32>
    %cst_40 = arith.constant dense<0xFF800000> : vector<16xf32>
    %85 = vector.multi_reduction <maximumf>, %84, %cst_40 [1] : vector<16x16xf32> to vector<16xf32>
    %86 = vector.shape_cast %85 : vector<16xf32> to vector<16x1xf32>
    %87 = vector.broadcast %86 : vector<16x1xf32> to vector<16x16xf32>
    %88 = arith.subf %84, %87 : vector<16x16xf32>
    %89 = math.exp %88 : vector<16x16xf32>
    %cst_41 = arith.constant dense<0.000000e+00> : vector<16xf32>
    %90 = vector.multi_reduction <add>, %89, %cst_41 [1] : vector<16x16xf32> to vector<16xf32>
    %91 = vector.shape_cast %90 : vector<16xf32> to vector<16x1xf32>
    %92 = tpu.reciprocal %91 {approx = true} : vector<16x1xf32> -> vector<16x1xf32>
    %93 = vector.broadcast %92 : vector<16x1xf32> to vector<16x16xf32>
    %94 = arith.mulf %89, %93 : vector<16x16xf32>
    %95 = arith.truncf %94 : vector<16x16xf32> to vector<16x16xbf16>
    %cst_42 = arith.constant dense<0.000000e+00> : vector<16x8xf32>
    %96 = tpu.matmul %95, %82, %cst_42 {dimension_numbers = #tpu.dot_dimension_numbers<[1], [0], [0], [1], [0, 0, 1, 1], [], []>} : vector<16x16xbf16>, vector<16x8xbf16>, vector<16x8xf32> -> vector<16x8xf32>
    %97 = vector.extract_strided_slice %36 {offsets = [0, 24], sizes = [16, 8], strides = [1, 1]} : vector<16x96xf32> to vector<16x8xf32>
    %98 = arith.truncf %97 : vector<16x8xf32> to vector<16x8xbf16>
    %99 = vector.extract_strided_slice %36 {offsets = [0, 56], sizes = [16, 8], strides = [1, 1]} : vector<16x96xf32> to vector<16x8xf32>
    %100 = arith.truncf %99 : vector<16x8xf32> to vector<16x8xbf16>
    %101 = vector.extract_strided_slice %36 {offsets = [0, 88], sizes = [16, 8], strides = [1, 1]} : vector<16x96xf32> to vector<16x8xf32>
    %102 = arith.truncf %101 : vector<16x8xf32> to vector<16x8xbf16>
    %cst_43 = arith.constant dense<0.000000e+00> : vector<16x16xf32>
    %103 = tpu.matmul %98, %100, %cst_43 {dimension_numbers = #tpu.dot_dimension_numbers<[1], [1], [0], [0], [0, 0, 1, 0], [], []>} : vector<16x8xbf16>, vector<16x8xbf16>, vector<16x16xf32> -> vector<16x16xf32>
    %104 = arith.addf %103, %12 : vector<16x16xf32>
    %cst_44 = arith.constant dense<0xFF800000> : vector<16xf32>
    %105 = vector.multi_reduction <maximumf>, %104, %cst_44 [1] : vector<16x16xf32> to vector<16xf32>
    %106 = vector.shape_cast %105 : vector<16xf32> to vector<16x1xf32>
    %107 = vector.broadcast %106 : vector<16x1xf32> to vector<16x16xf32>
    %108 = arith.subf %104, %107 : vector<16x16xf32>
    %109 = math.exp %108 : vector<16x16xf32>
    %cst_45 = arith.constant dense<0.000000e+00> : vector<16xf32>
    %110 = vector.multi_reduction <add>, %109, %cst_45 [1] : vector<16x16xf32> to vector<16xf32>
    %111 = vector.shape_cast %110 : vector<16xf32> to vector<16x1xf32>
    %112 = tpu.reciprocal %111 {approx = true} : vector<16x1xf32> -> vector<16x1xf32>
    %113 = vector.broadcast %112 : vector<16x1xf32> to vector<16x16xf32>
    %114 = arith.mulf %109, %113 : vector<16x16xf32>
    %115 = arith.truncf %114 : vector<16x16xf32> to vector<16x16xbf16>
    %cst_46 = arith.constant dense<0.000000e+00> : vector<16x8xf32>
    %116 = tpu.matmul %115, %102, %cst_46 {dimension_numbers = #tpu.dot_dimension_numbers<[1], [0], [0], [1], [0, 0, 1, 1], [], []>} : vector<16x16xbf16>, vector<16x8xbf16>, vector<16x8xf32> -> vector<16x8xf32>
    %117 = tpu.concatenate %56, %76, %96, %116 in 1 : vector<16x8xf32>, vector<16x8xf32>, vector<16x8xf32>, vector<16x8xf32> -> vector<16x32xf32>
    %118 = arith.truncf %117 : vector<16x32xf32> to vector<16x32xbf16>
    %cst_47 = arith.constant dense<0.000000e+00> : vector<16x32xf32>
    %119 = tpu.matmul %118, %18, %cst_47 {dimension_numbers = #tpu.dot_dimension_numbers<[1], [0], [0], [1], [0, 0, 1, 1], [], []>} : vector<16x32xbf16>, vector<32x32xbf16>, vector<16x32xf32> -> vector<16x32xf32>
    %120 = vector.broadcast %27 : vector<1x32xf32> to vector<16x32xf32>
    %121 = arith.addf %119, %120 : vector<16x32xf32>
    %122 = arith.addf %11, %121 : vector<16x32xf32>
    %cst_48 = arith.constant dense<0.000000e+00> : vector<16xf32>
    %123 = vector.multi_reduction <add>, %122, %cst_48 [1] : vector<16x32xf32> to vector<16xf32>
    %124 = vector.shape_cast %123 : vector<16xf32> to vector<16x1xf32>
    %cst_49 = arith.constant 3.200000e+01 : f32
    %125 = vector.broadcast %cst_49 : f32 to vector<16x1xf32>
    %126 = arith.divf %124, %125 : vector<16x1xf32>
    %127 = vector.broadcast %126 : vector<16x1xf32> to vector<16x32xf32>
    %128 = arith.subf %122, %127 : vector<16x32xf32>
    %129 = arith.mulf %128, %128 : vector<16x32xf32>
    %cst_50 = arith.constant dense<0.000000e+00> : vector<16xf32>
    %130 = vector.multi_reduction <add>, %129, %cst_50 [1] : vector<16x32xf32> to vector<16xf32>
    %131 = vector.shape_cast %130 : vector<16xf32> to vector<16x1xf32>
    %cst_51 = arith.constant 3.200000e+01 : f32
    %132 = vector.broadcast %cst_51 : f32 to vector<16x1xf32>
    %133 = arith.divf %131, %132 : vector<16x1xf32>
    %134 = vector.broadcast %126 : vector<16x1xf32> to vector<16x32xf32>
    %135 = arith.subf %122, %134 : vector<16x32xf32>
    %cst_52 = arith.constant 9.99999974E-6 : f32
    %136 = vector.broadcast %cst_52 : f32 to vector<16x1xf32>
    %137 = arith.addf %133, %136 : vector<16x1xf32>
    %138 = math.rsqrt %137 : vector<16x1xf32>
    %139 = vector.broadcast %138 : vector<16x1xf32> to vector<16x32xf32>
    %140 = arith.mulf %135, %139 : vector<16x32xf32>
    %141 = vector.broadcast %28 : vector<1x32xf32> to vector<16x32xf32>
    %142 = arith.mulf %140, %141 : vector<16x32xf32>
    %143 = vector.broadcast %29 : vector<1x32xf32> to vector<16x32xf32>
    %144 = arith.addf %142, %143 : vector<16x32xf32>
    %145 = arith.truncf %144 : vector<16x32xf32> to vector<16x32xbf16>
    %cst_53 = arith.constant dense<0.000000e+00> : vector<16x64xf32>
    %146 = tpu.matmul %145, %20, %cst_53 {dimension_numbers = #tpu.dot_dimension_numbers<[1], [0], [0], [1], [0, 0, 1, 1], [], []>} : vector<16x32xbf16>, vector<32x64xbf16>, vector<16x64xf32> -> vector<16x64xf32>
    %147 = vector.broadcast %22 : vector<1x64xf32> to vector<16x64xf32>
    %148 = arith.addf %146, %147 : vector<16x64xf32>
    %cst_54 = arith.constant 5.000000e-01 : f32
    %149 = vector.broadcast %cst_54 : f32 to vector<16x64xf32>
    %150 = arith.mulf %149, %148 : vector<16x64xf32>
    %cst_55 = arith.constant 0.707106769 : f32
    %151 = vector.broadcast %cst_55 : f32 to vector<16x64xf32>
    %152 = arith.mulf %148, %151 : vector<16x64xf32>
    %153 = math.erf %152 : vector<16x64xf32>
    %cst_56 = arith.constant 1.000000e+00 : f32
    %154 = vector.broadcast %cst_56 : f32 to vector<16x64xf32>
    %155 = arith.addf %154, %153 : vector<16x64xf32>
    %156 = arith.mulf %150, %155 : vector<16x64xf32>
    %157 = arith.truncf %156 : vector<16x64xf32> to vector<16x64xbf16>
    %cst_57 = arith.constant dense<0.000000e+00> : vector<16x32xf32>
    %158 = tpu.matmul %157, %24, %cst_57 {dimension_numbers = #tpu.dot_dimension_numbers<[1], [0], [0], [1], [0, 0, 1, 1], [], []>} : vector<16x64xbf16>, vector<64x32xbf16>, vector<16x32xf32> -> vector<16x32xf32>
    %159 = vector.broadcast %32 : vector<1x32xf32> to vector<16x32xf32>
    %160 = arith.addf %158, %159 : vector<16x32xf32>
    %161 = arith.addf %144, %160 : vector<16x32xf32>
    %cst_58 = arith.constant dense<0.000000e+00> : vector<16xf32>
    %162 = vector.multi_reduction <add>, %161, %cst_58 [1] : vector<16x32xf32> to vector<16xf32>
    %163 = vector.shape_cast %162 : vector<16xf32> to vector<16x1xf32>
    %cst_59 = arith.constant 3.200000e+01 : f32
    %164 = vector.broadcast %cst_59 : f32 to vector<16x1xf32>
    %165 = arith.divf %163, %164 : vector<16x1xf32>
    %166 = vector.broadcast %165 : vector<16x1xf32> to vector<16x32xf32>
    %167 = arith.subf %161, %166 : vector<16x32xf32>
    %168 = arith.mulf %167, %167 : vector<16x32xf32>
    %cst_60 = arith.constant dense<0.000000e+00> : vector<16xf32>
    %169 = vector.multi_reduction <add>, %168, %cst_60 [1] : vector<16x32xf32> to vector<16xf32>
    %170 = vector.shape_cast %169 : vector<16xf32> to vector<16x1xf32>
    %cst_61 = arith.constant 3.200000e+01 : f32
    %171 = vector.broadcast %cst_61 : f32 to vector<16x1xf32>
    %172 = arith.divf %170, %171 : vector<16x1xf32>
    %173 = vector.broadcast %165 : vector<16x1xf32> to vector<16x32xf32>
    %174 = arith.subf %161, %173 : vector<16x32xf32>
    %cst_62 = arith.constant 9.99999974E-6 : f32
    %175 = vector.broadcast %cst_62 : f32 to vector<16x1xf32>
    %176 = arith.addf %172, %175 : vector<16x1xf32>
    %177 = math.rsqrt %176 : vector<16x1xf32>
    %178 = vector.broadcast %177 : vector<16x1xf32> to vector<16x32xf32>
    %179 = arith.mulf %174, %178 : vector<16x32xf32>
    %180 = vector.broadcast %30 : vector<1x32xf32> to vector<16x32xf32>
    %181 = arith.mulf %179, %180 : vector<16x32xf32>
    %182 = vector.broadcast %31 : vector<1x32xf32> to vector<16x32xf32>
    %183 = arith.addf %181, %182 : vector<16x32xf32>
    %c1 = arith.constant 1 : index
    %c0_63 = arith.constant 0 : index
    %c0_64 = arith.constant 0 : index
    %184 = vector.load %arg5[%c1, %c0_63, %c0_64] : memref<2x32x96xbf16, #tpu.memory_space<vmem>>, vector<1x32x96xbf16>
    %185 = vector.shape_cast %184 : vector<1x32x96xbf16> to vector<32x96xbf16>
    %c1_65 = arith.constant 1 : index
    %c0_66 = arith.constant 0 : index
    %c0_67 = arith.constant 0 : index
    %186 = vector.load %arg6[%c1_65, %c0_66, %c0_67] : memref<2x1x96xf32, #tpu.memory_space<vmem>>, vector<1x1x96xf32>
    %187 = vector.shape_cast %186 : vector<1x1x96xf32> to vector<1x96xf32>
    %c1_68 = arith.constant 1 : index
    %c0_69 = arith.constant 0 : index
    %c0_70 = arith.constant 0 : index
    %188 = vector.load %arg7[%c1_68, %c0_69, %c0_70] : memref<2x32x32xbf16, #tpu.memory_space<vmem>>, vector<1x32x32xbf16>
    %189 = vector.shape_cast %188 : vector<1x32x32xbf16> to vector<32x32xbf16>
    %c1_71 = arith.constant 1 : index
    %c0_72 = arith.constant 0 : index
    %c0_73 = arith.constant 0 : index
    %190 = vector.load %arg8[%c1_71, %c0_72, %c0_73] : memref<2x32x64xbf16, #tpu.memory_space<vmem>>, vector<1x32x64xbf16>
    %191 = vector.shape_cast %190 : vector<1x32x64xbf16> to vector<32x64xbf16>
    %c1_74 = arith.constant 1 : index
    %c0_75 = arith.constant 0 : index
    %c0_76 = arith.constant 0 : index
    %192 = vector.load %arg9[%c1_74, %c0_75, %c0_76] : memref<2x1x64xf32, #tpu.memory_space<vmem>>, vector<1x1x64xf32>
    %193 = vector.shape_cast %192 : vector<1x1x64xf32> to vector<1x64xf32>
    %c1_77 = arith.constant 1 : index
    %c0_78 = arith.constant 0 : index
    %c0_79 = arith.constant 0 : index
    %194 = vector.load %arg10[%c1_77, %c0_78, %c0_79] : memref<2x64x32xbf16, #tpu.memory_space<vmem>>, vector<1x64x32xbf16>
    %195 = vector.shape_cast %194 : vector<1x64x32xbf16> to vector<64x32xbf16>
    %c1_80 = arith.constant 1 : index
    %c0_81 = arith.constant 0 : index
    %c0_82 = arith.constant 0 : index
    %196 = vector.load %arg11[%c1_80, %c0_81, %c0_82] : memref<2x6x32xf32, #tpu.memory_space<vmem>>, vector<1x6x32xf32>
    %197 = vector.shape_cast %196 : vector<1x6x32xf32> to vector<6x32xf32>
    %198 = vector.extract_strided_slice %197 {offsets = [0, 0], sizes = [1, 32], strides = [1, 1]} : vector<6x32xf32> to vector<1x32xf32>
    %199 = vector.extract_strided_slice %197 {offsets = [1, 0], sizes = [1, 32], strides = [1, 1]} : vector<6x32xf32> to vector<1x32xf32>
    %200 = vector.extract_strided_slice %197 {offsets = [2, 0], sizes = [1, 32], strides = [1, 1]} : vector<6x32xf32> to vector<1x32xf32>
    %201 = vector.extract_strided_slice %197 {offsets = [3, 0], sizes = [1, 32], strides = [1, 1]} : vector<6x32xf32> to vector<1x32xf32>
    %202 = vector.extract_strided_slice %197 {offsets = [4, 0], sizes = [1, 32], strides = [1, 1]} : vector<6x32xf32> to vector<1x32xf32>
    %203 = vector.extract_strided_slice %197 {offsets = [5, 0], sizes = [1, 32], strides = [1, 1]} : vector<6x32xf32> to vector<1x32xf32>
    %204 = arith.truncf %183 : vector<16x32xf32> to vector<16x32xbf16>
    %cst_83 = arith.constant dense<0.000000e+00> : vector<16x96xf32>
    %205 = tpu.matmul %204, %185, %cst_83 {dimension_numbers = #tpu.dot_dimension_numbers<[1], [0], [0], [1], [0, 0, 1, 1], [], []>} : vector<16x32xbf16>, vector<32x96xbf16>, vector<16x96xf32> -> vector<16x96xf32>
    %206 = vector.broadcast %187 : vector<1x96xf32> to vector<16x96xf32>
    %207 = arith.addf %205, %206 : vector<16x96xf32>
    %208 = vector.extract_strided_slice %207 {offsets = [0, 0], sizes = [16, 8], strides = [1, 1]} : vector<16x96xf32> to vector<16x8xf32>
    %209 = arith.truncf %208 : vector<16x8xf32> to vector<16x8xbf16>
    %210 = vector.extract_strided_slice %207 {offsets = [0, 32], sizes = [16, 8], strides = [1, 1]} : vector<16x96xf32> to vector<16x8xf32>
    %211 = arith.truncf %210 : vector<16x8xf32> to vector<16x8xbf16>
    %212 = vector.extract_strided_slice %207 {offsets = [0, 64], sizes = [16, 8], strides = [1, 1]} : vector<16x96xf32> to vector<16x8xf32>
    %213 = arith.truncf %212 : vector<16x8xf32> to vector<16x8xbf16>
    %cst_84 = arith.constant dense<0.000000e+00> : vector<16x16xf32>
    %214 = tpu.matmul %209, %211, %cst_84 {dimension_numbers = #tpu.dot_dimension_numbers<[1], [1], [0], [0], [0, 0, 1, 0], [], []>} : vector<16x8xbf16>, vector<16x8xbf16>, vector<16x16xf32> -> vector<16x16xf32>
    %215 = arith.addf %214, %12 : vector<16x16xf32>
    %cst_85 = arith.constant dense<0xFF800000> : vector<16xf32>
    %216 = vector.multi_reduction <maximumf>, %215, %cst_85 [1] : vector<16x16xf32> to vector<16xf32>
    %217 = vector.shape_cast %216 : vector<16xf32> to vector<16x1xf32>
    %218 = vector.broadcast %217 : vector<16x1xf32> to vector<16x16xf32>
    %219 = arith.subf %215, %218 : vector<16x16xf32>
    %220 = math.exp %219 : vector<16x16xf32>
    %cst_86 = arith.constant dense<0.000000e+00> : vector<16xf32>
    %221 = vector.multi_reduction <add>, %220, %cst_86 [1] : vector<16x16xf32> to vector<16xf32>
    %222 = vector.shape_cast %221 : vector<16xf32> to vector<16x1xf32>
    %223 = tpu.reciprocal %222 {approx = true} : vector<16x1xf32> -> vector<16x1xf32>
    %224 = vector.broadcast %223 : vector<16x1xf32> to vector<16x16xf32>
    %225 = arith.mulf %220, %224 : vector<16x16xf32>
    %226 = arith.truncf %225 : vector<16x16xf32> to vector<16x16xbf16>
    %cst_87 = arith.constant dense<0.000000e+00> : vector<16x8xf32>
    %227 = tpu.matmul %226, %213, %cst_87 {dimension_numbers = #tpu.dot_dimension_numbers<[1], [0], [0], [1], [0, 0, 1, 1], [], []>} : vector<16x16xbf16>, vector<16x8xbf16>, vector<16x8xf32> -> vector<16x8xf32>
    %228 = vector.extract_strided_slice %207 {offsets = [0, 8], sizes = [16, 8], strides = [1, 1]} : vector<16x96xf32> to vector<16x8xf32>
    %229 = arith.truncf %228 : vector<16x8xf32> to vector<16x8xbf16>
    %230 = vector.extract_strided_slice %207 {offsets = [0, 40], sizes = [16, 8], strides = [1, 1]} : vector<16x96xf32> to vector<16x8xf32>
    %231 = arith.truncf %230 : vector<16x8xf32> to vector<16x8xbf16>
    %232 = vector.extract_strided_slice %207 {offsets = [0, 72], sizes = [16, 8], strides = [1, 1]} : vector<16x96xf32> to vector<16x8xf32>
    %233 = arith.truncf %232 : vector<16x8xf32> to vector<16x8xbf16>
    %cst_88 = arith.constant dense<0.000000e+00> : vector<16x16xf32>
    %234 = tpu.matmul %229, %231, %cst_88 {dimension_numbers = #tpu.dot_dimension_numbers<[1], [1], [0], [0], [0, 0, 1, 0], [], []>} : vector<16x8xbf16>, vector<16x8xbf16>, vector<16x16xf32> -> vector<16x16xf32>
    %235 = arith.addf %234, %12 : vector<16x16xf32>
    %cst_89 = arith.constant dense<0xFF800000> : vector<16xf32>
    %236 = vector.multi_reduction <maximumf>, %235, %cst_89 [1] : vector<16x16xf32> to vector<16xf32>
    %237 = vector.shape_cast %236 : vector<16xf32> to vector<16x1xf32>
    %238 = vector.broadcast %237 : vector<16x1xf32> to vector<16x16xf32>
    %239 = arith.subf %235, %238 : vector<16x16xf32>
    %240 = math.exp %239 : vector<16x16xf32>
    %cst_90 = arith.constant dense<0.000000e+00> : vector<16xf32>
    %241 = vector.multi_reduction <add>, %240, %cst_90 [1] : vector<16x16xf32> to vector<16xf32>
    %242 = vector.shape_cast %241 : vector<16xf32> to vector<16x1xf32>
    %243 = tpu.reciprocal %242 {approx = true} : vector<16x1xf32> -> vector<16x1xf32>
    %244 = vector.broadcast %243 : vector<16x1xf32> to vector<16x16xf32>
    %245 = arith.mulf %240, %244 : vector<16x16xf32>
    %246 = arith.truncf %245 : vector<16x16xf32> to vector<16x16xbf16>
    %cst_91 = arith.constant dense<0.000000e+00> : vector<16x8xf32>
    %247 = tpu.matmul %246, %233, %cst_91 {dimension_numbers = #tpu.dot_dimension_numbers<[1], [0], [0], [1], [0, 0, 1, 1], [], []>} : vector<16x16xbf16>, vector<16x8xbf16>, vector<16x8xf32> -> vector<16x8xf32>
    %248 = vector.extract_strided_slice %207 {offsets = [0, 16], sizes = [16, 8], strides = [1, 1]} : vector<16x96xf32> to vector<16x8xf32>
    %249 = arith.truncf %248 : vector<16x8xf32> to vector<16x8xbf16>
    %250 = vector.extract_strided_slice %207 {offsets = [0, 48], sizes = [16, 8], strides = [1, 1]} : vector<16x96xf32> to vector<16x8xf32>
    %251 = arith.truncf %250 : vector<16x8xf32> to vector<16x8xbf16>
    %252 = vector.extract_strided_slice %207 {offsets = [0, 80], sizes = [16, 8], strides = [1, 1]} : vector<16x96xf32> to vector<16x8xf32>
    %253 = arith.truncf %252 : vector<16x8xf32> to vector<16x8xbf16>
    %cst_92 = arith.constant dense<0.000000e+00> : vector<16x16xf32>
    %254 = tpu.matmul %249, %251, %cst_92 {dimension_numbers = #tpu.dot_dimension_numbers<[1], [1], [0], [0], [0, 0, 1, 0], [], []>} : vector<16x8xbf16>, vector<16x8xbf16>, vector<16x16xf32> -> vector<16x16xf32>
    %255 = arith.addf %254, %12 : vector<16x16xf32>
    %cst_93 = arith.constant dense<0xFF800000> : vector<16xf32>
    %256 = vector.multi_reduction <maximumf>, %255, %cst_93 [1] : vector<16x16xf32> to vector<16xf32>
    %257 = vector.shape_cast %256 : vector<16xf32> to vector<16x1xf32>
    %258 = vector.broadcast %257 : vector<16x1xf32> to vector<16x16xf32>
    %259 = arith.subf %255, %258 : vector<16x16xf32>
    %260 = math.exp %259 : vector<16x16xf32>
    %cst_94 = arith.constant dense<0.000000e+00> : vector<16xf32>
    %261 = vector.multi_reduction <add>, %260, %cst_94 [1] : vector<16x16xf32> to vector<16xf32>
    %262 = vector.shape_cast %261 : vector<16xf32> to vector<16x1xf32>
    %263 = tpu.reciprocal %262 {approx = true} : vector<16x1xf32> -> vector<16x1xf32>
    %264 = vector.broadcast %263 : vector<16x1xf32> to vector<16x16xf32>
    %265 = arith.mulf %260, %264 : vector<16x16xf32>
    %266 = arith.truncf %265 : vector<16x16xf32> to vector<16x16xbf16>
    %cst_95 = arith.constant dense<0.000000e+00> : vector<16x8xf32>
    %267 = tpu.matmul %266, %253, %cst_95 {dimension_numbers = #tpu.dot_dimension_numbers<[1], [0], [0], [1], [0, 0, 1, 1], [], []>} : vector<16x16xbf16>, vector<16x8xbf16>, vector<16x8xf32> -> vector<16x8xf32>
    %268 = vector.extract_strided_slice %207 {offsets = [0, 24], sizes = [16, 8], strides = [1, 1]} : vector<16x96xf32> to vector<16x8xf32>
    %269 = arith.truncf %268 : vector<16x8xf32> to vector<16x8xbf16>
    %270 = vector.extract_strided_slice %207 {offsets = [0, 56], sizes = [16, 8], strides = [1, 1]} : vector<16x96xf32> to vector<16x8xf32>
    %271 = arith.truncf %270 : vector<16x8xf32> to vector<16x8xbf16>
    %272 = vector.extract_strided_slice %207 {offsets = [0, 88], sizes = [16, 8], strides = [1, 1]} : vector<16x96xf32> to vector<16x8xf32>
    %273 = arith.truncf %272 : vector<16x8xf32> to vector<16x8xbf16>
    %cst_96 = arith.constant dense<0.000000e+00> : vector<16x16xf32>
    %274 = tpu.matmul %269, %271, %cst_96 {dimension_numbers = #tpu.dot_dimension_numbers<[1], [1], [0], [0], [0, 0, 1, 0], [], []>} : vector<16x8xbf16>, vector<16x8xbf16>, vector<16x16xf32> -> vector<16x16xf32>
    %275 = arith.addf %274, %12 : vector<16x16xf32>
    %cst_97 = arith.constant dense<0xFF800000> : vector<16xf32>
    %276 = vector.multi_reduction <maximumf>, %275, %cst_97 [1] : vector<16x16xf32> to vector<16xf32>
    %277 = vector.shape_cast %276 : vector<16xf32> to vector<16x1xf32>
    %278 = vector.broadcast %277 : vector<16x1xf32> to vector<16x16xf32>
    %279 = arith.subf %275, %278 : vector<16x16xf32>
    %280 = math.exp %279 : vector<16x16xf32>
    %cst_98 = arith.constant dense<0.000000e+00> : vector<16xf32>
    %281 = vector.multi_reduction <add>, %280, %cst_98 [1] : vector<16x16xf32> to vector<16xf32>
    %282 = vector.shape_cast %281 : vector<16xf32> to vector<16x1xf32>
    %283 = tpu.reciprocal %282 {approx = true} : vector<16x1xf32> -> vector<16x1xf32>
    %284 = vector.broadcast %283 : vector<16x1xf32> to vector<16x16xf32>
    %285 = arith.mulf %280, %284 : vector<16x16xf32>
    %286 = arith.truncf %285 : vector<16x16xf32> to vector<16x16xbf16>
    %cst_99 = arith.constant dense<0.000000e+00> : vector<16x8xf32>
    %287 = tpu.matmul %286, %273, %cst_99 {dimension_numbers = #tpu.dot_dimension_numbers<[1], [0], [0], [1], [0, 0, 1, 1], [], []>} : vector<16x16xbf16>, vector<16x8xbf16>, vector<16x8xf32> -> vector<16x8xf32>
    %288 = tpu.concatenate %227, %247, %267, %287 in 1 : vector<16x8xf32>, vector<16x8xf32>, vector<16x8xf32>, vector<16x8xf32> -> vector<16x32xf32>
    %289 = arith.truncf %288 : vector<16x32xf32> to vector<16x32xbf16>
    %cst_100 = arith.constant dense<0.000000e+00> : vector<16x32xf32>
    %290 = tpu.matmul %289, %189, %cst_100 {dimension_numbers = #tpu.dot_dimension_numbers<[1], [0], [0], [1], [0, 0, 1, 1], [], []>} : vector<16x32xbf16>, vector<32x32xbf16>, vector<16x32xf32> -> vector<16x32xf32>
    %291 = vector.broadcast %198 : vector<1x32xf32> to vector<16x32xf32>
    %292 = arith.addf %290, %291 : vector<16x32xf32>
    %293 = arith.addf %183, %292 : vector<16x32xf32>
    %cst_101 = arith.constant dense<0.000000e+00> : vector<16xf32>
    %294 = vector.multi_reduction <add>, %293, %cst_101 [1] : vector<16x32xf32> to vector<16xf32>
    %295 = vector.shape_cast %294 : vector<16xf32> to vector<16x1xf32>
    %cst_102 = arith.constant 3.200000e+01 : f32
    %296 = vector.broadcast %cst_102 : f32 to vector<16x1xf32>
    %297 = arith.divf %295, %296 : vector<16x1xf32>
    %298 = vector.broadcast %297 : vector<16x1xf32> to vector<16x32xf32>
    %299 = arith.subf %293, %298 : vector<16x32xf32>
    %300 = arith.mulf %299, %299 : vector<16x32xf32>
    %cst_103 = arith.constant dense<0.000000e+00> : vector<16xf32>
    %301 = vector.multi_reduction <add>, %300, %cst_103 [1] : vector<16x32xf32> to vector<16xf32>
    %302 = vector.shape_cast %301 : vector<16xf32> to vector<16x1xf32>
    %cst_104 = arith.constant 3.200000e+01 : f32
    %303 = vector.broadcast %cst_104 : f32 to vector<16x1xf32>
    %304 = arith.divf %302, %303 : vector<16x1xf32>
    %305 = vector.broadcast %297 : vector<16x1xf32> to vector<16x32xf32>
    %306 = arith.subf %293, %305 : vector<16x32xf32>
    %cst_105 = arith.constant 9.99999974E-6 : f32
    %307 = vector.broadcast %cst_105 : f32 to vector<16x1xf32>
    %308 = arith.addf %304, %307 : vector<16x1xf32>
    %309 = math.rsqrt %308 : vector<16x1xf32>
    %310 = vector.broadcast %309 : vector<16x1xf32> to vector<16x32xf32>
    %311 = arith.mulf %306, %310 : vector<16x32xf32>
    %312 = vector.broadcast %199 : vector<1x32xf32> to vector<16x32xf32>
    %313 = arith.mulf %311, %312 : vector<16x32xf32>
    %314 = vector.broadcast %200 : vector<1x32xf32> to vector<16x32xf32>
    %315 = arith.addf %313, %314 : vector<16x32xf32>
    %316 = arith.truncf %315 : vector<16x32xf32> to vector<16x32xbf16>
    %cst_106 = arith.constant dense<0.000000e+00> : vector<16x64xf32>
    %317 = tpu.matmul %316, %191, %cst_106 {dimension_numbers = #tpu.dot_dimension_numbers<[1], [0], [0], [1], [0, 0, 1, 1], [], []>} : vector<16x32xbf16>, vector<32x64xbf16>, vector<16x64xf32> -> vector<16x64xf32>
    %318 = vector.broadcast %193 : vector<1x64xf32> to vector<16x64xf32>
    %319 = arith.addf %317, %318 : vector<16x64xf32>
    %cst_107 = arith.constant 5.000000e-01 : f32
    %320 = vector.broadcast %cst_107 : f32 to vector<16x64xf32>
    %321 = arith.mulf %320, %319 : vector<16x64xf32>
    %cst_108 = arith.constant 0.707106769 : f32
    %322 = vector.broadcast %cst_108 : f32 to vector<16x64xf32>
    %323 = arith.mulf %319, %322 : vector<16x64xf32>
    %324 = math.erf %323 : vector<16x64xf32>
    %cst_109 = arith.constant 1.000000e+00 : f32
    %325 = vector.broadcast %cst_109 : f32 to vector<16x64xf32>
    %326 = arith.addf %325, %324 : vector<16x64xf32>
    %327 = arith.mulf %321, %326 : vector<16x64xf32>
    %328 = arith.truncf %327 : vector<16x64xf32> to vector<16x64xbf16>
    %cst_110 = arith.constant dense<0.000000e+00> : vector<16x32xf32>
    %329 = tpu.matmul %328, %195, %cst_110 {dimension_numbers = #tpu.dot_dimension_numbers<[1], [0], [0], [1], [0, 0, 1, 1], [], []>} : vector<16x64xbf16>, vector<64x32xbf16>, vector<16x32xf32> -> vector<16x32xf32>
    %330 = vector.broadcast %203 : vector<1x32xf32> to vector<16x32xf32>
    %331 = arith.addf %329, %330 : vector<16x32xf32>
    %332 = arith.addf %315, %331 : vector<16x32xf32>
    %cst_111 = arith.constant dense<0.000000e+00> : vector<16xf32>
    %333 = vector.multi_reduction <add>, %332, %cst_111 [1] : vector<16x32xf32> to vector<16xf32>
    %334 = vector.shape_cast %333 : vector<16xf32> to vector<16x1xf32>
    %cst_112 = arith.constant 3.200000e+01 : f32
    %335 = vector.broadcast %cst_112 : f32 to vector<16x1xf32>
    %336 = arith.divf %334, %335 : vector<16x1xf32>
    %337 = vector.broadcast %336 : vector<16x1xf32> to vector<16x32xf32>
    %338 = arith.subf %332, %337 : vector<16x32xf32>
    %339 = arith.mulf %338, %338 : vector<16x32xf32>
    %cst_113 = arith.constant dense<0.000000e+00> : vector<16xf32>
    %340 = vector.multi_reduction <add>, %339, %cst_113 [1] : vector<16x32xf32> to vector<16xf32>
    %341 = vector.shape_cast %340 : vector<16xf32> to vector<16x1xf32>
    %cst_114 = arith.constant 3.200000e+01 : f32
    %342 = vector.broadcast %cst_114 : f32 to vector<16x1xf32>
    %343 = arith.divf %341, %342 : vector<16x1xf32>
    %344 = vector.broadcast %336 : vector<16x1xf32> to vector<16x32xf32>
    %345 = arith.subf %332, %344 : vector<16x32xf32>
    %cst_115 = arith.constant 9.99999974E-6 : f32
    %346 = vector.broadcast %cst_115 : f32 to vector<16x1xf32>
    %347 = arith.addf %343, %346 : vector<16x1xf32>
    %348 = math.rsqrt %347 : vector<16x1xf32>
    %349 = vector.broadcast %348 : vector<16x1xf32> to vector<16x32xf32>
    %350 = arith.mulf %345, %349 : vector<16x32xf32>
    %351 = vector.broadcast %201 : vector<1x32xf32> to vector<16x32xf32>
    %352 = arith.mulf %350, %351 : vector<16x32xf32>
    %353 = vector.broadcast %202 : vector<1x32xf32> to vector<16x32xf32>
    %354 = arith.addf %352, %353 : vector<16x32xf32>
    %355 = arith.truncf %354 : vector<16x32xf32> to vector<16x32xbf16>
    %c0_116 = arith.constant 0 : index
    %c0_117 = arith.constant 0 : index
    %356 = vector.load %arg12[%c0_116, %c0_117] : memref<32x128xbf16, #tpu.memory_space<vmem>>, vector<32x128xbf16>
    %cst_118 = arith.constant dense<0.000000e+00> : vector<16x128xf32>
    %357 = tpu.matmul %355, %356, %cst_118 {dimension_numbers = #tpu.dot_dimension_numbers<[1], [0], [0], [1], [0, 0, 1, 1], [], []>} : vector<16x32xbf16>, vector<32x128xbf16>, vector<16x128xf32> -> vector<16x128xf32>
    %c0_119 = arith.constant 0 : index
    %c0_120 = arith.constant 0 : index
    %358 = vector.load %arg13[%c0_119, %c0_120] : memref<16x128xf32, #tpu.memory_space<vmem>>, vector<16x128xf32>
    tpu.vector_store %arg13[%c0_119, %c0_120], %357 {strides = array<i32>} : memref<16x128xf32, #tpu.memory_space<vmem>>, vector<16x128xf32>,
    return
  }
  func.func @transform_0(%arg0: i32) -> (i32, i32) {
    %c0_i32 = arith.constant 0 : i32
    %c0_i32_0 = arith.constant 0 : i32
    %c0_i32_1 = arith.constant 0 : i32
    return %c0_i32, %c0_i32_0 : i32, i32
  }
  func.func @transform_1(%arg0: i32) -> (i32, i32) {
    %c0_i32 = arith.constant 0 : i32
    %c0_i32_0 = arith.constant 0 : i32
    %c0_i32_1 = arith.constant 0 : i32
    return %c0_i32, %c0_i32_0 : i32, i32
  }
  func.func @transform_2(%arg0: i32) -> (i32, i32) {
    %c0_i32 = arith.constant 0 : i32
    %c0_i32_0 = arith.constant 0 : i32
    %c0_i32_1 = arith.constant 0 : i32
    return %c0_i32, %c0_i32_0 : i32, i32
  }
  func.func @transform_3(%arg0: i32) -> (i32, i32) {
    %c0_i32 = arith.constant 0 : i32
    %c0_i32_0 = arith.constant 0 : i32
    %c0_i32_1 = arith.constant 0 : i32
    return %c0_i32, %c0_i32_0 : i32, i32
  }
  func.func @transform_4(%arg0: i32) -> (i32, i32, i32) {
    %c0_i32 = arith.constant 0 : i32
    %c0_i32_0 = arith.constant 0 : i32
    %c0_i32_1 = arith.constant 0 : i32
    %c0_i32_2 = arith.constant 0 : i32
    return %c0_i32, %c0_i32_0, %c0_i32_1 : i32, i32, i32
  }
  func.func @transform_5(%arg0: i32) -> (i32, i32, i32) {
    %c0_i32 = arith.constant 0 : i32
    %c0_i32_0 = arith.constant 0 : i32
    %c0_i32_1 = arith.constant 0 : i32
    %c0_i32_2 = arith.constant 0 : i32
    return %c0_i32, %c0_i32_0, %c0_i32_1 : i32, i32, i32
  }
  func.func @transform_6(%arg0: i32) -> (i32, i32, i32) {
    %c0_i32 = arith.constant 0 : i32
    %c0_i32_0 = arith.constant 0 : i32
    %c0_i32_1 = arith.constant 0 : i32
    %c0_i32_2 = arith.constant 0 : i32
    return %c0_i32, %c0_i32_0, %c0_i32_1 : i32, i32, i32
  }
  func.func @transform_7(%arg0: i32) -> (i32, i32, i32) {
    %c0_i32 = arith.constant 0 : i32
    %c0_i32_0 = arith.constant 0 : i32
    %c0_i32_1 = arith.constant 0 : i32
    %c0_i32_2 = arith.constant 0 : i32
    return %c0_i32, %c0_i32_0, %c0_i32_1 : i32, i32, i32
  }
  func.func @transform_8(%arg0: i32) -> (i32, i32, i32) {
    %c0_i32 = arith.constant 0 : i32
    %c0_i32_0 = arith.constant 0 : i32
    %c0_i32_1 = arith.constant 0 : i32
    %c0_i32_2 = arith.constant 0 : i32
    return %c0_i32, %c0_i32_0, %c0_i32_1 : i32, i32, i32
  }
  func.func @transform_9(%arg0: i32) -> (i32, i32, i32) {
    %c0_i32 = arith.constant 0 : i32
    %c0_i32_0 = arith.constant 0 : i32
    %c0_i32_1 = arith.constant 0 : i32
    %c0_i32_2 = arith.constant 0 : i32
    return %c0_i32, %c0_i32_0, %c0_i32_1 : i32, i32, i32
  }
  func.func @transform_10(%arg0: i32) -> (i32, i32, i32) {
    %c0_i32 = arith.constant 0 : i32
    %c0_i32_0 = arith.constant 0 : i32
    %c0_i32_1 = arith.constant 0 : i32
    %c0_i32_2 = arith.constant 0 : i32
    return %c0_i32, %c0_i32_0, %c0_i32_1 : i32, i32, i32
  }
  func.func @transform_11(%arg0: i32) -> (i32, i32) {
    %c0_i32 = arith.constant 0 : i32
    %c0_i32_0 = arith.constant 0 : i32
    %c0_i32_1 = arith.constant 0 : i32
    return %c0_i32, %c0_i32_0 : i32, i32
  }
  func.func @transform_12(%arg0: i32) -> (i32, i32) {
    %c0_i32 = arith.constant 0 : i32
    %c0_i32_0 = arith.constant 0 : i32
    %c0_i32_1 = arith.constant 0 : i32
    return %c0_i32, %c0_i32_0 : i32, i32
  }
}

</mosaic_0001>

<llo_original>
// kernel: osu_transformer_lm_forward.1
$region0: #{osu_transformer_lm_forward.1}
  #allocation0 [shape = 'u32[]', space=smem, size = 0x4, offset = 0x4, fixed_abs, tag = 'smem constant byte address 0x4 - core index']
  #allocation1 [shape = 'u32[144,128]{1,0:T(1,128)}', space=vmem, size = 0x12000, scoped, tag = 'internal scratch']
  %s0 = inlined_call_operand.vmem [shape: s32[16,1], index: 0, kind: input, shape index: {}]
  %s1 = inlined_call_operand.vmem [shape: bf16[64,32], index: 1, kind: input, shape index: {}]
  %s2 = inlined_call_operand.vmem [shape: f32[16,32], index: 2, kind: input, shape index: {}]
  %s3 = inlined_call_operand.vmem [shape: f32[16,16], index: 3, kind: input, shape index: {}]
  %s4 = inlined_call_operand.vmem [shape: bf16[2,32,96], index: 4, kind: input, shape index: {}]
  %s5 = inlined_call_operand.vmem [shape: f32[2,1,96], index: 5, kind: input, shape index: {}]
  %s6 = inlined_call_operand.vmem [shape: bf16[2,32,32], index: 6, kind: input, shape index: {}]
  %s7 = inlined_call_operand.vmem [shape: bf16[2,32,64], index: 7, kind: input, shape index: {}]
  %s8 = inlined_call_operand.vmem [shape: f32[2,1,64], index: 8, kind: input, shape index: {}]
  %s9 = inlined_call_operand.vmem [shape: bf16[2,64,32], index: 9, kind: input, shape index: {}]
  %s10 = inlined_call_operand.vmem [shape: f32[2,6,32], index: 10, kind: input, shape index: {}]
  %s11 = inlined_call_operand.vmem [shape: bf16[32,128], index: 11, kind: input, shape index: {}]
  %s12 = inlined_call_operand.hbm [shape: f32[16,128], index: 12, kind: output, shape index: {}]
  %s13 = sld [smem:[#allocation0]]
  $region58: #{osu_transformer_lm_forward.1} parent=0
    _
  %s15 = ssub.s32 1, %s13
  %s16 = scalar_select 0, %s15, %s13
  $region1: #{osu_transformer_lm_forward.1} parent=0
    #allocation2 [shape = 'u8[8192]{0}', space=vmem, size = 0x2000, scoped, tag = 'output window, operand 0, single buffered']
    #allocation3 [shape = 's32[1]{0}', space=sflag, size = 0x4, scoped, tag = 'scoped memory for osu_transformer_lm_forward.1']
    %17 = vsyncpa [#allocation3], 0
    // Predicated region
    $region2: #{osu_transformer_lm_forward.1} parent=1 // pred_check
      _
    $region3: #{osu_transformer_lm_forward.1} parent=1 // pred_check_branch
      %19 = sbr.rel (0) target = $region5
    $region4: #{osu_transformer_lm_forward.1} parent=1 // pred_region
      _
    $region5: #{osu_transformer_lm_forward.1} parent=1 // pred_fallthru
      _
    // Predicated region
    $region6: #{osu_transformer_lm_forward.1} parent=1 // pred_check
      _
    $region7: #{osu_transformer_lm_forward.1} parent=1 // pred_check_branch
      %21 = sbr.rel (0) target = $region9
    $region8: #{osu_transformer_lm_forward.1} parent=1 // pred_region
      _
    $region9: #{osu_transformer_lm_forward.1} parent=1 // pred_fallthru
      _
    // Predicated region
    $region10: #{osu_transformer_lm_forward.1} parent=1 // pred_check
      _
    $region11: #{osu_transformer_lm_forward.1} parent=1 // pred_check_branch
      %23 = sbr.rel (0) target = $region13
    $region12: #{osu_transformer_lm_forward.1} parent=1 // pred_region
      _
    $region13: #{osu_transformer_lm_forward.1} parent=1 // pred_fallthru
      _
    // Predicated region
    $region14: #{osu_transformer_lm_forward.1} parent=1 // pred_check
      _
    $region15: #{osu_transformer_lm_forward.1} parent=1 // pred_check_branch
      %25 = sbr.rel (0) target = $region17
    $region16: #{osu_transformer_lm_forward.1} parent=1 // pred_region
      _
    $region17: #{osu_transformer_lm_forward.1} parent=1 // pred_fallthru
      _
    // Predicated region
    $region18: #{osu_transformer_lm_forward.1} parent=1 // pred_check
      _
    $region19: #{osu_transformer_lm_forward.1} parent=1 // pred_check_branch
      %27 = sbr.rel (0) target = $region21
    $region20: #{osu_transformer_lm_forward.1} parent=1 // pred_region
      _
    $region21: #{osu_transformer_lm_forward.1} parent=1 // pred_fallthru
      _
    // Predicated region
    $region22: #{osu_transformer_lm_forward.1} parent=1 // pred_check
      _
    $region23: #{osu_transformer_lm_forward.1} parent=1 // pred_check_branch
      %29 = sbr.rel (0) target = $region25
    $region24: #{osu_transformer_lm_forward.1} parent=1 // pred_region
      _
    $region25: #{osu_transformer_lm_forward.1} parent=1 // pred_fallthru
      _
    // Predicated region
    $region26: #{osu_transformer_lm_forward.1} parent=1 // pred_check
      _
    $region27: #{osu_transformer_lm_forward.1} parent=1 // pred_check_branch
      %31 = sbr.rel (0) target = $region29
    $region28: #{osu_transformer_lm_forward.1} parent=1 // pred_region
      _
    $region29: #{osu_transformer_lm_forward.1} parent=1 // pred_fallthru
      _
    // Predicated region
    $region30: #{osu_transformer_lm_forward.1} parent=1 // pred_check
      _
    $region31: #{osu_transformer_lm_forward.1} parent=1 // pred_check_branch
      %33 = sbr.rel (0) target = $region33
    $region32: #{osu_transformer_lm_forward.1} parent=1 // pred_region
      _
    $region33: #{osu_transformer_lm_forward.1} parent=1 // pred_fallthru
      _
    // Predicated region
    $region34: #{osu_transformer_lm_forward.1} parent=1 // pred_check
      _
    $region35: #{osu_transformer_lm_forward.1} parent=1 // pred_check_branch
      %35 = sbr.rel (0) target = $region37
    $region36: #{osu_transformer_lm_forward.1} parent=1 // pred_region
      _
    $region37: #{osu_transformer_lm_forward.1} parent=1 // pred_fallthru
      _
    // Predicated region
    $region38: #{osu_transformer_lm_forward.1} parent=1 // pred_check
      _
    $region39: #{osu_transformer_lm_forward.1} parent=1 // pred_check_branch
      %37 = sbr.rel (0) target = $region41
    $region40: #{osu_transformer_lm_forward.1} parent=1 // pred_region
      _
    $region41: #{osu_transformer_lm_forward.1} parent=1 // pred_fallthru
      _
    // Predicated region
    $region42: #{osu_transformer_lm_forward.1} parent=1 // pred_check
      _
    $region43: #{osu_transformer_lm_forward.1} parent=1 // pred_check_branch
      %39 = sbr.rel (0) target = $region45
    $region44: #{osu_transformer_lm_forward.1} parent=1 // pred_region
      _
    $region45: #{osu_transformer_lm_forward.1} parent=1 // pred_fallthru
      _
    // Predicated region
    $region46: #{osu_transformer_lm_forward.1} parent=1 // pred_check
      _
    $region47: #{osu_transformer_lm_forward.1} parent=1 // pred_check_branch
      %41 = sbr.rel (0) target = $region49
    $region48: #{osu_transformer_lm_forward.1} parent=1 // pred_region
      _
    $region49: #{osu_transformer_lm_forward.1} parent=1 // pred_fallthru
      _
    %v43 = vld [vmem:[%s0] sm:$0xff]
    %v44 = vld [vmem:[%s0 + $0x8] sm:$0xff]
    %v45 = vlaneseq
    %v46 = vand.u32 %v45, 127
    %47 = vset.pattern.permute.xlu0 0
    %48 = vperm.xlu0 %47, %v43
    %v49 = vpop.permute.xlu0 %48
    %50 = vset.pattern.permute.xlu0 0
    %51 = vperm.xlu0 %50, %v44
    %v52 = vpop.permute.xlu0 %51
    %vm53 = vcmp.eq.s32.totalorder %v46, %v49
    %vm54 = vcmp.eq.s32.totalorder %v46, %v52
    %v55 = vsel %vm53, 1.0, 0.0
    %v56 = vsel %vm54, 1.0, 0.0
    %v57 = vpack.c.bf16 %v56, %v55
    %v58 = vld [vmem:[%s1] sm:$0xf]
    %v59 = vld [vmem:[%s1 + $0x4] sm:$0xf]
    %v60 = vld [vmem:[%s1 + $0x8] sm:$0xf]
    %v61 = vld [vmem:[%s1 + $0xc] sm:$0xf]
    %v62 = vld [vmem:[%s1 + $0x10] sm:$0xf]
    %v63 = vld [vmem:[%s1 + $0x14] sm:$0xf]
    %v64 = vld [vmem:[%s1 + $0x18] sm:$0xf]
    %v65 = vld [vmem:[%s1 + $0x1c] sm:$0xf]
    %v66 = vld [vmem:[%s2] sm:$0xff]
    %v67 = vld [vmem:[%s2 + $0x8] sm:$0xff]
    %v76 = vunpack.c.l.b16 %v58
    %v77 = vunpack.c.l.b16 %v59
    %v78 = vunpack.c.l.b16 %v60
    %v79 = vunpack.c.l.b16 %v61
    %v80 = vunpack.c.l.b16 %v62
    %v81 = vunpack.c.l.b16 %v63
    %v82 = vunpack.c.l.b16 %v64
    %v83 = vunpack.c.l.b16 %v65
    %v84 = vpack.c.b16 %v77, %v76
    %v85 = vpack.c.b16 %v79, %v78
    %v86 = vpack.c.b16 %v81, %v80
    %v87 = vpack.c.b16 %v83, %v82
    %vm92 = vcmask 523264
    %v94 = vsel %vm92, %v57, 0
    %96 = vmatprep.subr.bf16.mxu0 0
    %97 = vmatpush1.bf16.msra.mxu0 %v84
    %98 = vmatprep.subr.bf16.mxu0 0
    %99 = vmatpush1.bf16.msra.mxu0 %v85
    %100 = vmatprep.subr.bf16.mxu0 0
    %101 = vmatpush1.bf16.msra.mxu0 %v86
    %102 = vmatprep.subr.bf16.mxu0 0
    %103 = vmatpush1.bf16.msra.mxu0 %v87
    %104 = vmatprep.subr.bf16.mxu0 0
    %105 = vmatpush1.bf16.msra.mxu0 0
    %106 = vmatprep.subr.bf16.mxu0 0
    %107 = vmatpush1.bf16.msra.mxu0 0
    %108 = vmatprep.subr.bf16.mxu0 0
    %109 = vmatpush1.bf16.msra.mxu0 0
    %110 = vmatprep.subr.bf16.mxu0 0
    %111 = vmatpush1.bf16.msra.mxu0 0
    %112 = vmatprep.subr.bf16.mxu0 0
    %113 = vmatpush1.bf16.msra.mxu0 0
    %114 = vmatprep.subr.bf16.mxu0 0
    %115 = vmatpush1.bf16.msra.mxu0 0
    %116 = vmatprep.subr.bf16.mxu0 0
    %117 = vmatpush1.bf16.msra.mxu0 0
    %118 = vmatprep.subr.bf16.mxu0 0
    %119 = vmatpush1.bf16.msra.mxu0 0
    %120 = vmatprep.subr.bf16.mxu0 0
    %121 = vmatpush1.bf16.msra.mxu0 0
    %122 = vmatprep.subr.bf16.mxu0 0
    %123 = vmatpush1.bf16.msra.mxu0 0
    %124 = vmatprep.subr.bf16.mxu0 0
    %125 = vmatpush1.bf16.msra.mxu0 0
    %126 = vmatprep.subr.bf16.mxu0 0
    %127 = vmatpush1.bf16.msra.mxu0 0
    %128 = vmatprep.mubr.bf16.mxu0 0
    %129 = vmatmul.mubr.bf16.gmra.mrb[0].mxu0 %v94
    %v130 = vpop.f32.mrb[0].mxu0
    %v131 = vadd.f32 %v66, %v130
    %v132 = vpop.f32.mrb[0].mxu0
    %v133 = vpop.f32.mrb[0].mxu0
    %v134 = vadd.f32 %v67, %v133
    %v135 = vpop.f32.mrb[0].mxu0
    %136 = vdwg.mxu0
    %v137 = vld [vmem:[%s3] sm:$0xff]
    %v138 = vld [vmem:[%s3 + $0x8] sm:$0xff]
    %v139 = vld [vmem:[%s4] sm:$0xf]
    %v140 = vld [vmem:[%s4 + $0x4] sm:$0xf]
    %v141 = vld [vmem:[%s4 + $0x8] sm:$0xf]
    %v142 = vld [vmem:[%s4 + $0xc] sm:$0xf]
    %v143 = vld [vmem:[%s5] sm:$0x1]
    %v144 = vld [vmem:[%s6] sm:$0xf]
    %v145 = vld [vmem:[%s6 + $0x4] sm:$0xf]
    %v146 = vld [vmem:[%s6 + $0x8] sm:$0xf]
    %v147 = vld [vmem:[%s6 + $0xc] sm:$0xf]
    %v148 = vld [vmem:[%s7] sm:$0xf]
    %v149 = vld [vmem:[%s7 + $0x4] sm:$0xf]
    %v150 = vld [vmem:[%s7 + $0x8] sm:$0xf]
    %v151 = vld [vmem:[%s7 + $0xc] sm:$0xf]
    %v152 = vld [vmem:[%s8] sm:$0x1]
    %v153 = vld [vmem:[%s9] sm:$0xf]
    %v154 = vld [vmem:[%s9 + $0x4] sm:$0xf]
    %v155 = vld [vmem:[%s9 + $0x8] sm:$0xf]
    %v156 = vld [vmem:[%s9 + $0xc] sm:$0xf]
    %v157 = vld [vmem:[%s9 + $0x10] sm:$0xf]
    %v158 = vld [vmem:[%s9 + $0x14] sm:$0xf]
    %v159 = vld [vmem:[%s9 + $0x18] sm:$0xf]
    %v160 = vld [vmem:[%s9 + $0x1c] sm:$0xf]
    %v161 = vld [vmem:[%s10] sm:$0x3f]
    %v162 = vpack.c.bf16 %v134, %v131
    %v164 = vlaneseq
    %v165 = vshrl.u32 %v164, 7
    %v166 = vsub.s32 0, %v165
    %v167 = vrot.slane %v143, %v166
    %v173 = vunpack.c.l.b16 %v139
    %v174 = vunpack.c.l.b16 %v140
    %v175 = vunpack.c.l.b16 %v141
    %v176 = vunpack.c.l.b16 %v142
    %v177 = vpack.c.b16 %v174, %v173
    %v178 = vpack.c.b16 %v176, %v175
    %vm181 = vcmask 261120
    %v183 = vsel %vm181, %v162, 0
    %185 = vmatprep.subr.bf16.mxu0 0
    %186 = vmatpush1.bf16.msra.mxu0 %v177
    %187 = vmatprep.subr.bf16.mxu0 0
    %188 = vmatpush1.bf16.msra.mxu0 %v178
    %189 = vmatprep.subr.bf16.mxu0 0
    %190 = vmatpush1.bf16.msra.mxu0 0
    %191 = vmatprep.subr.bf16.mxu0 0
    %192 = vmatpush1.bf16.msra.mxu0 0
    %193 = vmatprep.subr.bf16.mxu0 0
    %194 = vmatpush1.bf16.msra.mxu0 0
    %195 = vmatprep.subr.bf16.mxu0 0
    %196 = vmatpush1.bf16.msra.mxu0 0
    %197 = vmatprep.subr.bf16.mxu0 0
    %198 = vmatpush1.bf16.msra.mxu0 0
    %199 = vmatprep.subr.bf16.mxu0 0
    %200 = vmatpush1.bf16.msra.mxu0 0
    %201 = vmatprep.subr.bf16.mxu0 0
    %202 = vmatpush1.bf16.msra.mxu0 0
    %203 = vmatprep.subr.bf16.mxu0 0
    %204 = vmatpush1.bf16.msra.mxu0 0
    %205 = vmatprep.subr.bf16.mxu0 0
    %206 = vmatpush1.bf16.msra.mxu0 0
    %207 = vmatprep.subr.bf16.mxu0 0
    %208 = vmatpush1.bf16.msra.mxu0 0
    %209 = vmatprep.subr.bf16.mxu0 0
    %210 = vmatpush1.bf16.msra.mxu0 0
    %211 = vmatprep.subr.bf16.mxu0 0
    %212 = vmatpush1.bf16.msra.mxu0 0
    %213 = vmatprep.subr.bf16.mxu0 0
    %214 = vmatpush1.bf16.msra.mxu0 0
    %215 = vmatprep.subr.bf16.mxu0 0
    %216 = vmatpush1.bf16.msra.mxu0 0
    %217 = vmatprep.mubr.bf16.mxu0 0
    %218 = vmatmul.mubr.bf16.gmra.mrb[0].mxu0 %v183
    %v219 = vpop.f32.mrb[0].mxu0
    %v220 = vadd.f32 %v167, %v219
    %v221 = vpop.f32.mrb[0].mxu0
    %v222 = vpop.f32.mrb[0].mxu0
    %v223 = vadd.f32 %v167, %v222
    %v224 = vpop.f32.mrb[0].mxu0
    %225 = vdwg.mxu0
    %v226 = vpack.c.bf16 %v223, %v220
    %228 = vrot.lane.b32.xlu0 %v226, 96
    %v229 = vpop.permute.xlu0 %228
    %vm230 = vcmask 64512
    %v232 = vsel %vm230, %v226, 0
    %v235 = vsel %vm230, %v229, 0
    %237 = vmatprep.subr.bf16.mxu0 0
    %238 = vmatpush1.bf16.xpose.msra.mxu0 %v235
    %239 = vmatprep.subr.bf16.mxu0 0
    %240 = vmatpush1.bf16.xpose.msra.mxu0 0
    %241 = vmatprep.subr.bf16.mxu0 0
    %242 = vmatpush1.bf16.xpose.msra.mxu0 0
    %243 = vmatprep.subr.bf16.mxu0 0
    %244 = vmatpush1.bf16.xpose.msra.mxu0 0
    %245 = vmatprep.subr.bf16.mxu0 0
    %246 = vmatpush1.bf16.xpose.msra.mxu0 0
    %247 = vmatprep.subr.bf16.mxu0 0
    %248 = vmatpush1.bf16.xpose.msra.mxu0 0
    %249 = vmatprep.subr.bf16.mxu0 0
    %250 = vmatpush1.bf16.xpose.msra.mxu0 0
    %251 = vmatprep.subr.bf16.mxu0 0
    %252 = vmatpush1.bf16.xpose.msra.mxu0 0
    %253 = vmatprep.subr.bf16.mxu0 0
    %254 = vmatpush1.bf16.xpose.msra.mxu0 0
    %255 = vmatprep.subr.bf16.mxu0 0
    %256 = vmatpush1.bf16.xpose.msra.mxu0 0
    %257 = vmatprep.subr.bf16.mxu0 0
    %258 = vmatpush1.bf16.xpose.msra.mxu0 0
    %259 = vmatprep.subr.bf16.mxu0 0
    %260 = vmatpush1.bf16.xpose.msra.mxu0 0
    %261 = vmatprep.subr.bf16.mxu0 0
    %262 = vmatpush1.bf16.xpose.msra.mxu0 0
    %263 = vmatprep.subr.bf16.mxu0 0
    %264 = vmatpush1.bf16.xpose.msra.mxu0 0
    %265 = vmatprep.subr.bf16.mxu0 0
    %266 = vmatpush1.bf16.xpose.msra.mxu0 0
    %267 = vmatprep.subr.bf16.mxu0 0
    %268 = vmatpush1.bf16.xpose.msra.mxu0 0
    %269 = vmatprep.mubr.bf16.mxu0 0
    %270 = vmatmul.mubr.bf16.gmra.mrb[0].mxu0 %v232
    %v271 = vpop.f32.mrb[0].mxu0
    %v272 = vadd.f32 %v137, %v271
    %v273 = vpop.f32.mrb[0].mxu0
    %v274 = vpop.f32.mrb[0].mxu0
    %v275 = vadd.f32 %v138, %v274
    %v276 = vpop.f32.mrb[0].mxu0
    %277 = vdwg.mxu0
    %vm278 = vcmask 130048
    %v279 = vsel %vm278, %v272, -inf
    %280 = vmax.xlane.f32.xlu0 %v279
    %v281 = vpop.xlane.xlu0 %280
    %v282 = vsel %vm278, %v275, -inf
    %283 = vmax.xlane.f32.xlu0 %v282
    %v284 = vpop.xlane.xlu0 %283
    %v285 = vsub.f32 %v272, %v281
    %v286 = vsub.f32 %v275, %v284
    %v287 = vmul.f32 %v285, 1.442695
    %v288 = vpow.pop %v287
    %v289 = vmul.f32 %v286, 1.442695
    %v290 = vpow.pop %v289
    %v291 = vsel %vm278, %v288, 0.0
    %292 = vadd.xlane.f32.xlu0 %v291
    %v293 = vpop.xlane.xlu0 %292
    %v294 = vsel %vm278, %v290, 0.0
    %295 = vadd.xlane.f32.xlu0 %v294
    %v296 = vpop.xlane.xlu0 %295
    %v297 = vrcp.pop %v293
    %v298 = vrcp.pop %v296
    %v299 = vmul.f32 %v288, %v297
    %v300 = vmul.f32 %v290, %v298
    %v301 = vpack.c.bf16 %v300, %v299
    %302 = vrot.lane.b32.xlu0 %v226, 64
    %v303 = vpop.permute.xlu0 %302
    %v306 = vsel %vm278, %v301, 0
    %308 = vmatprep.subr.bf16.mxu0 0
    %309 = vmatpush1.bf16.msra.mxu0 %v303
    %310 = vmatprep.subr.bf16.mxu0 0
    %311 = vmatpush1.bf16.msra.mxu0 0
    %312 = vmatprep.subr.bf16.mxu0 0
    %313 = vmatpush1.bf16.msra.mxu0 0
    %314 = vmatprep.subr.bf16.mxu0 0
    %315 = vmatpush1.bf16.msra.mxu0 0
    %316 = vmatprep.subr.bf16.mxu0 0
    %317 = vmatpush1.bf16.msra.mxu0 0
    %318 = vmatprep.subr.bf16.mxu0 0
    %319 = vmatpush1.bf16.msra.mxu0 0
    %320 = vmatprep.subr.bf16.mxu0 0
    %321 = vmatpush1.bf16.msra.mxu0 0
    %322 = vmatprep.subr.bf16.mxu0 0
    %323 = vmatpush1.bf16.msra.mxu0 0
    %324 = vmatprep.subr.bf16.mxu0 0
    %325 = vmatpush1.bf16.msra.mxu0 0
    %326 = vmatprep.subr.bf16.mxu0 0
    %327 = vmatpush1.bf16.msra.mxu0 0
    %328 = vmatprep.subr.bf16.mxu0 0
    %329 = vmatpush1.bf16.msra.mxu0 0
    %330 = vmatprep.subr.bf16.mxu0 0
    %331 = vmatpush1.bf16.msra.mxu0 0
    %332 = vmatprep.subr.bf16.mxu0 0
    %333 = vmatpush1.bf16.msra.mxu0 0
    %334 = vmatprep.subr.bf16.mxu0 0
    %335 = vmatpush1.bf16.msra.mxu0 0
    %336 = vmatprep.subr.bf16.mxu0 0
    %337 = vmatpush1.bf16.msra.mxu0 0
    %338 = vmatprep.subr.bf16.mxu0 0
    %339 = vmatpush1.bf16.msra.mxu0 0
    %340 = vmatprep.mubr.bf16.mxu0 0
    %341 = vmatmul.mubr.bf16.gmra.mrb[0].mxu0 %v306
    %v342 = vpop.f32.mrb[0].mxu0
    %v343 = vadd.f32 0.0, %v342
    %v344 = vpop.f32.mrb[0].mxu0
    %v345 = vpop.f32.mrb[0].mxu0
    %v346 = vadd.f32 0.0, %v345
    %v347 = vpop.f32.mrb[0].mxu0
    %348 = vdwg.mxu0
    %349 = vrot.lane.b32.xlu0 %v226, 120
    %v350 = vpop.permute.xlu0 %349
    %351 = vrot.lane.b32.xlu0 %v226, 88
    %v352 = vpop.permute.xlu0 %351
    %v354 = vsel %vm230, %v350, 0
    %v357 = vsel %vm230, %v352, 0
    %359 = vmatprep.subr.bf16.mxu0 0
    %360 = vmatpush1.bf16.xpose.msra.mxu0 %v357
    %361 = vmatprep.subr.bf16.mxu0 0
    %362 = vmatpush1.bf16.xpose.msra.mxu0 0
    %363 = vmatprep.subr.bf16.mxu0 0
    %364 = vmatpush1.bf16.xpose.msra.mxu0 0
    %365 = vmatprep.subr.bf16.mxu0 0
    %366 = vmatpush1.bf16.xpose.msra.mxu0 0
    %367 = vmatprep.subr.bf16.mxu0 0
    %368 = vmatpush1.bf16.xpose.msra.mxu0 0
    %369 = vmatprep.subr.bf16.mxu0 0
    %370 = vmatpush1.bf16.xpose.msra.mxu0 0
    %371 = vmatprep.subr.bf16.mxu0 0
    %372 = vmatpush1.bf16.xpose.msra.mxu0 0
    %373 = vmatprep.subr.bf16.mxu0 0
    %374 = vmatpush1.bf16.xpose.msra.mxu0 0
    %375 = vmatprep.subr.bf16.mxu0 0
    %376 = vmatpush1.bf16.xpose.msra.mxu0 0
    %377 = vmatprep.subr.bf16.mxu0 0
    %378 = vmatpush1.bf16.xpose.msra.mxu0 0
    %379 = vmatprep.subr.bf16.mxu0 0
    %380 = vmatpush1.bf16.xpose.msra.mxu0 0
    %381 = vmatprep.subr.bf16.mxu0 0
    %382 = vmatpush1.bf16.xpose.msra.mxu0 0
    %383 = vmatprep.subr.bf16.mxu0 0
    %384 = vmatpush1.bf16.xpose.msra.mxu0 0
    %385 = vmatprep.subr.bf16.mxu0 0
    %386 = vmatpush1.bf16.xpose.msra.mxu0 0
    %387 = vmatprep.subr.bf16.mxu0 0
    %388 = vmatpush1.bf16.xpose.msra.mxu0 0
    %389 = vmatprep.subr.bf16.mxu0 0
    %390 = vmatpush1.bf16.xpose.msra.mxu0 0
    %391 = vmatprep.mubr.bf16.mxu0 0
    %392 = vmatmul.mubr.bf16.gmra.mrb[0].mxu0 %v354
    %v393 = vpop.f32.mrb[0].mxu0
    %v394 = vadd.f32 %v137, %v393
    %v395 = vpop.f32.mrb[0].mxu0
    %v396 = vpop.f32.mrb[0].mxu0
    %v397 = vadd.f32 %v138, %v396
    %v398 = vpop.f32.mrb[0].mxu0
    %399 = vdwg.mxu0
    %v400 = vsel %vm278, %v394, -inf
    %401 = vmax.xlane.f32.xlu0 %v400
    %v402 = vpop.xlane.xlu0 %401
    %v403 = vsel %vm278, %v397, -inf
    %404 = vmax.xlane.f32.xlu0 %v403
    %v405 = vpop.xlane.xlu0 %404
    %v406 = vsub.f32 %v394, %v402
    %v407 = vsub.f32 %v397, %v405
    %v408 = vmul.f32 %v406, 1.442695
    %v409 = vpow.pop %v408
    %v410 = vmul.f32 %v407, 1.442695
    %v411 = vpow.pop %v410
    %v412 = vsel %vm278, %v409, 0.0
    %413 = vadd.xlane.f32.xlu0 %v412
    %v414 = vpop.xlane.xlu0 %413
    %v415 = vsel %vm278, %v411, 0.0
    %416 = vadd.xlane.f32.xlu0 %v415
    %v417 = vpop.xlane.xlu0 %416
    %v418 = vrcp.pop %v414
    %v419 = vrcp.pop %v417
    %v420 = vmul.f32 %v409, %v418
    %v421 = vmul.f32 %v411, %v419
    %v422 = vpack.c.bf16 %v421, %v420
    %423 = vrot.lane.b32.xlu0 %v226, 56
    %v424 = vpop.permute.xlu0 %423
    %v427 = vsel %vm278, %v422, 0
    %429 = vmatprep.subr.bf16.mxu0 0
    %430 = vmatpush1.bf16.msra.mxu0 %v424
    %431 = vmatprep.subr.bf16.mxu0 0
    %432 = vmatpush1.bf16.msra.mxu0 0
    %433 = vmatprep.subr.bf16.mxu0 0
    %434 = vmatpush1.bf16.msra.mxu0 0
    %435 = vmatprep.subr.bf16.mxu0 0
    %436 = vmatpush1.bf16.msra.mxu0 0
    %437 = vmatprep.subr.bf16.mxu0 0
    %438 = vmatpush1.bf16.msra.mxu0 0
    %439 = vmatprep.subr.bf16.mxu0 0
    %440 = vmatpush1.bf16.msra.mxu0 0
    %441 = vmatprep.subr.bf16.mxu0 0
    %442 = vmatpush1.bf16.msra.mxu0 0
    %443 = vmatprep.subr.bf16.mxu0 0
    %444 = vmatpush1.bf16.msra.mxu0 0
    %445 = vmatprep.subr.bf16.mxu0 0
    %446 = vmatpush1.bf16.msra.mxu0 0
    %447 = vmatprep.subr.bf16.mxu0 0
    %448 = vmatpush1.bf16.msra.mxu0 0
    %449 = vmatprep.subr.bf16.mxu0 0
    %450 = vmatpush1.bf16.msra.mxu0 0
    %451 = vmatprep.subr.bf16.mxu0 0
    %452 = vmatpush1.bf16.msra.mxu0 0
    %453 = vmatprep.subr.bf16.mxu0 0
    %454 = vmatpush1.bf16.msra.mxu0 0
    %455 = vmatprep.subr.bf16.mxu0 0
    %456 = vmatpush1.bf16.msra.mxu0 0
    %457 = vmatprep.subr.bf16.mxu0 0
    %458 = vmatpush1.bf16.msra.mxu0 0
    %459 = vmatprep.subr.bf16.mxu0 0
    %460 = vmatpush1.bf16.msra.mxu0 0
    %461 = vmatprep.mubr.bf16.mxu0 0
    %462 = vmatmul.mubr.bf16.gmra.mrb[0].mxu0 %v427
    %v463 = vpop.f32.mrb[0].mxu0
    %v464 = vadd.f32 0.0, %v463
    %v465 = vpop.f32.mrb[0].mxu0
    %v466 = vpop.f32.mrb[0].mxu0
    %v467 = vadd.f32 0.0, %v466
    %v468 = vpop.f32.mrb[0].mxu0
    %469 = vdwg.mxu0
    %470 = vrot.lane.b32.xlu0 %v226, 112
    %v471 = vpop.permute.xlu0 %470
    %472 = vrot.lane.b32.xlu0 %v226, 80
    %v473 = vpop.permute.xlu0 %472
    %v475 = vsel %vm230, %v471, 0
    %v478 = vsel %vm230, %v473, 0
    %480 = vmatprep.subr.bf16.mxu0 0
    %481 = vmatpush1.bf16.xpose.msra.mxu0 %v478
    %482 = vmatprep.subr.bf16.mxu0 0
    %483 = vmatpush1.bf16.xpose.msra.mxu0 0
    %484 = vmatprep.subr.bf16.mxu0 0
    %485 = vmatpush1.bf16.xpose.msra.mxu0 0
    %486 = vmatprep.subr.bf16.mxu0 0
    %487 = vmatpush1.bf16.xpose.msra.mxu0 0
    %488 = vmatprep.subr.bf16.mxu0 0
    %489 = vmatpush1.bf16.xpose.msra.mxu0 0
    %490 = vmatprep.subr.bf16.mxu0 0
    %491 = vmatpush1.bf16.xpose.msra.mxu0 0
    %492 = vmatprep.subr.bf16.mxu0 0
    %493 = vmatpush1.bf16.xpose.msra.mxu0 0
    %494 = vmatprep.subr.bf16.mxu0 0
    %495 = vmatpush1.bf16.xpose.msra.mxu0 0
    %496 = vmatprep.subr.bf16.mxu0 0
    %497 = vmatpush1.bf16.xpose.msra.mxu0 0
    %498 = vmatprep.subr.bf16.mxu0 0
    %499 = vmatpush1.bf16.xpose.msra.mxu0 0
    %500 = vmatprep.subr.bf16.mxu0 0
    %501 = vmatpush1.bf16.xpose.msra.mxu0 0
    %502 = vmatprep.subr.bf16.mxu0 0
    %503 = vmatpush1.bf16.xpose.msra.mxu0 0
    %504 = vmatprep.subr.bf16.mxu0 0
    %505 = vmatpush1.bf16.xpose.msra.mxu0 0
    %506 = vmatprep.subr.bf16.mxu0 0
    %507 = vmatpush1.bf16.xpose.msra.mxu0 0
    %508 = vmatprep.subr.bf16.mxu0 0
    %509 = vmatpush1.bf16.xpose.msra.mxu0 0
    %510 = vmatprep.subr.bf16.mxu0 0
    %511 = vmatpush1.bf16.xpose.msra.mxu0 0
    %512 = vmatprep.mubr.bf16.mxu0 0
    %513 = vmatmul.mubr.bf16.gmra.mrb[0].mxu0 %v475
    %v514 = vpop.f32.mrb[0].mxu0
    %v515 = vadd.f32 %v137, %v514
    %v516 = vpop.f32.mrb[0].mxu0
    %v517 = vpop.f32.mrb[0].mxu0
    %v518 = vadd.f32 %v138, %v517
    %v519 = vpop.f32.mrb[0].mxu0
    %520 = vdwg.mxu0
    %v521 = vsel %vm278, %v515, -inf
    %522 = vmax.xlane.f32.xlu0 %v521
    %v523 = vpop.xlane.xlu0 %522
    %v524 = vsel %vm278, %v518, -inf
    %525 = vmax.xlane.f32.xlu0 %v524
    %v526 = vpop.xlane.xlu0 %525
    %v527 = vsub.f32 %v515, %v523
    %v528 = vsub.f32 %v518, %v526
    %v529 = vmul.f32 %v527, 1.442695
    %v530 = vpow.pop %v529
    %v531 = vmul.f32 %v528, 1.442695
    %v532 = vpow.pop %v531
    %v533 = vsel %vm278, %v530, 0.0
    %534 = vadd.xlane.f32.xlu0 %v533
    %v535 = vpop.xlane.xlu0 %534
    %v536 = vsel %vm278, %v532, 0.0
    %537 = vadd.xlane.f32.xlu0 %v536
    %v538 = vpop.xlane.xlu0 %537
    %v539 = vrcp.pop %v535
    %v540 = vrcp.pop %v538
    %v541 = vmul.f32 %v530, %v539
    %v542 = vmul.f32 %v532, %v540
    %v543 = vpack.c.bf16 %v542, %v541
    %544 = vrot.lane.b32.xlu0 %v226, 48
    %v545 = vpop.permute.xlu0 %544
    %v548 = vsel %vm278, %v543, 0
    %550 = vmatprep.subr.bf16.mxu0 0
    %551 = vmatpush1.bf16.msra.mxu0 %v545
    %552 = vmatprep.subr.bf16.mxu0 0
    %553 = vmatpush1.bf16.msra.mxu0 0
    %554 = vmatprep.subr.bf16.mxu0 0
    %555 = vmatpush1.bf16.msra.mxu0 0
    %556 = vmatprep.subr.bf16.mxu0 0
    %557 = vmatpush1.bf16.msra.mxu0 0
    %558 = vmatprep.subr.bf16.mxu0 0
    %559 = vmatpush1.bf16.msra.mxu0 0
    %560 = vmatprep.subr.bf16.mxu0 0
    %561 = vmatpush1.bf16.msra.mxu0 0
    %562 = vmatprep.subr.bf16.mxu0 0
    %563 = vmatpush1.bf16.msra.mxu0 0
    %564 = vmatprep.subr.bf16.mxu0 0
    %565 = vmatpush1.bf16.msra.mxu0 0
    %566 = vmatprep.subr.bf16.mxu0 0
    %567 = vmatpush1.bf16.msra.mxu0 0
    %568 = vmatprep.subr.bf16.mxu0 0
    %569 = vmatpush1.bf16.msra.mxu0 0
    %570 = vmatprep.subr.bf16.mxu0 0
    %571 = vmatpush1.bf16.msra.mxu0 0
    %572 = vmatprep.subr.bf16.mxu0 0
    %573 = vmatpush1.bf16.msra.mxu0 0
    %574 = vmatprep.subr.bf16.mxu0 0
    %575 = vmatpush1.bf16.msra.mxu0 0
    %576 = vmatprep.subr.bf16.mxu0 0
    %577 = vmatpush1.bf16.msra.mxu0 0
    %578 = vmatprep.subr.bf16.mxu0 0
    %579 = vmatpush1.bf16.msra.mxu0 0
    %580 = vmatprep.subr.bf16.mxu0 0
    %581 = vmatpush1.bf16.msra.mxu0 0
    %582 = vmatprep.mubr.bf16.mxu0 0
    %583 = vmatmul.mubr.bf16.gmra.mrb[0].mxu0 %v548
    %v584 = vpop.f32.mrb[0].mxu0
    %v585 = vadd.f32 0.0, %v584
    %v586 = vpop.f32.mrb[0].mxu0
    %v587 = vpop.f32.mrb[0].mxu0
    %v588 = vadd.f32 0.0, %v587
    %v589 = vpop.f32.mrb[0].mxu0
    %590 = vdwg.mxu0
    %591 = vrot.lane.b32.xlu0 %v226, 104
    %v592 = vpop.permute.xlu0 %591
    %593 = vrot.lane.b32.xlu0 %v226, 72
    %v594 = vpop.permute.xlu0 %593
    %v596 = vsel %vm230, %v592, 0
    %v599 = vsel %vm230, %v594, 0
    %601 = vmatprep.subr.bf16.mxu0 0
    %602 = vmatpush1.bf16.xpose.msra.mxu0 %v599
    %603 = vmatprep.subr.bf16.mxu0 0
    %604 = vmatpush1.bf16.xpose.msra.mxu0 0
    %605 = vmatprep.subr.bf16.mxu0 0
    %606 = vmatpush1.bf16.xpose.msra.mxu0 0
    %607 = vmatprep.subr.bf16.mxu0 0
    %608 = vmatpush1.bf16.xpose.msra.mxu0 0
    %609 = vmatprep.subr.bf16.mxu0 0
    %610 = vmatpush1.bf16.xpose.msra.mxu0 0
    %611 = vmatprep.subr.bf16.mxu0 0
    %612 = vmatpush1.bf16.xpose.msra.mxu0 0
    %613 = vmatprep.subr.bf16.mxu0 0
    %614 = vmatpush1.bf16.xpose.msra.mxu0 0
    %615 = vmatprep.subr.bf16.mxu0 0
    %616 = vmatpush1.bf16.xpose.msra.mxu0 0
    %617 = vmatprep.subr.bf16.mxu0 0
    %618 = vmatpush1.bf16.xpose.msra.mxu0 0
    %619 = vmatprep.subr.bf16.mxu0 0
    %620 = vmatpush1.bf16.xpose.msra.mxu0 0
    %621 = vmatprep.subr.bf16.mxu0 0
    %622 = vmatpush1.bf16.xpose.msra.mxu0 0
    %623 = vmatprep.subr.bf16.mxu0 0
    %624 = vmatpush1.bf16.xpose.msra.mxu0 0
    %625 = vmatprep.subr.bf16.mxu0 0
    %626 = vmatpush1.bf16.xpose.msra.mxu0 0
    %627 = vmatprep.subr.bf16.mxu0 0
    %628 = vmatpush1.bf16.xpose.msra.mxu0 0
    %629 = vmatprep.subr.bf16.mxu0 0
    %630 = vmatpush1.bf16.xpose.msra.mxu0 0
    %631 = vmatprep.subr.bf16.mxu0 0
    %632 = vmatpush1.bf16.xpose.msra.mxu0 0
    %633 = vmatprep.mubr.bf16.mxu0 0
    %634 = vmatmul.mubr.bf16.gmra.mrb[0].mxu0 %v596
    %v635 = vpop.f32.mrb[0].mxu0
    %v636 = vadd.f32 %v137, %v635
    %v637 = vpop.f32.mrb[0].mxu0
    %v638 = vpop.f32.mrb[0].mxu0
    %v639 = vadd.f32 %v138, %v638
    %v640 = vpop.f32.mrb[0].mxu0
    %641 = vdwg.mxu0
    %v642 = vsel %vm278, %v636, -inf
    %643 = vmax.xlane.f32.xlu0 %v642
    %v644 = vpop.xlane.xlu0 %643
    %v645 = vsel %vm278, %v639, -inf
    %646 = vmax.xlane.f32.xlu0 %v645
    %v647 = vpop.xlane.xlu0 %646
    %v648 = vsub.f32 %v636, %v644
    %v649 = vsub.f32 %v639, %v647
    %v650 = vmul.f32 %v648, 1.442695
    %v651 = vpow.pop %v650
    %v652 = vmul.f32 %v649, 1.442695
    %v653 = vpow.pop %v652
    %v654 = vsel %vm278, %v651, 0.0
    %655 = vadd.xlane.f32.xlu0 %v654
    %v656 = vpop.xlane.xlu0 %655
    %v657 = vsel %vm278, %v653, 0.0
    %658 = vadd.xlane.f32.xlu0 %v657
    %v659 = vpop.xlane.xlu0 %658
    %v660 = vrcp.pop %v656
    %v661 = vrcp.pop %v659
    %v662 = vmul.f32 %v651, %v660
    %v663 = vmul.f32 %v653, %v661
    %v664 = vpack.c.bf16 %v663, %v662
    %665 = vrot.lane.b32.xlu0 %v226, 40
    %v666 = vpop.permute.xlu0 %665
    %v669 = vsel %vm278, %v664, 0
    %671 = vmatprep.subr.bf16.mxu0 0
    %672 = vmatpush1.bf16.msra.mxu0 %v666
    %673 = vmatprep.subr.bf16.mxu0 0
    %674 = vmatpush1.bf16.msra.mxu0 0
    %675 = vmatprep.subr.bf16.mxu0 0
    %676 = vmatpush1.bf16.msra.mxu0 0
    %677 = vmatprep.subr.bf16.mxu0 0
    %678 = vmatpush1.bf16.msra.mxu0 0
    %679 = vmatprep.subr.bf16.mxu0 0
    %680 = vmatpush1.bf16.msra.mxu0 0
    %681 = vmatprep.subr.bf16.mxu0 0
    %682 = vmatpush1.bf16.msra.mxu0 0
    %683 = vmatprep.subr.bf16.mxu0 0
    %684 = vmatpush1.bf16.msra.mxu0 0
    %685 = vmatprep.subr.bf16.mxu0 0
    %686 = vmatpush1.bf16.msra.mxu0 0
    %687 = vmatprep.subr.bf16.mxu0 0
    %688 = vmatpush1.bf16.msra.mxu0 0
    %689 = vmatprep.subr.bf16.mxu0 0
    %690 = vmatpush1.bf16.msra.mxu0 0
    %691 = vmatprep.subr.bf16.mxu0 0
    %692 = vmatpush1.bf16.msra.mxu0 0
    %693 = vmatprep.subr.bf16.mxu0 0
    %694 = vmatpush1.bf16.msra.mxu0 0
    %695 = vmatprep.subr.bf16.mxu0 0
    %696 = vmatpush1.bf16.msra.mxu0 0
    %697 = vmatprep.subr.bf16.mxu0 0
    %698 = vmatpush1.bf16.msra.mxu0 0
    %699 = vmatprep.subr.bf16.mxu0 0
    %700 = vmatpush1.bf16.msra.mxu0 0
    %701 = vmatprep.subr.bf16.mxu0 0
    %702 = vmatpush1.bf16.msra.mxu0 0
    %703 = vmatprep.mubr.bf16.mxu0 0
    %704 = vmatmul.mubr.bf16.gmra.mrb[0].mxu0 %v669
    %v705 = vpop.f32.mrb[0].mxu0
    %v706 = vadd.f32 0.0, %v705
    %v707 = vpop.f32.mrb[0].mxu0
    %v708 = vpop.f32.mrb[0].mxu0
    %v709 = vadd.f32 0.0, %v708
    %v710 = vpop.f32.mrb[0].mxu0
    %711 = vdwg.mxu0
    %714 = vrot.lane.b32.xlu0 %v464, 8
    %v715 = vpop.permute.xlu0 %714
    %716 = vrot.lane.b32.xlu0 %v467, 8
    %v717 = vpop.permute.xlu0 %716
    %722 = vrot.lane.b32.xlu0 %v585, 16
    %v723 = vpop.permute.xlu0 %722
    %724 = vrot.lane.b32.xlu0 %v588, 16
    %v725 = vpop.permute.xlu0 %724
    %730 = vrot.lane.b32.xlu0 %v706, 24
    %v731 = vpop.permute.xlu0 %730
    %732 = vrot.lane.b32.xlu0 %v709, 24
    %v733 = vpop.permute.xlu0 %732
    %v736 = vsel %vm230, %v343, %v715
    %v737 = vsel %vm230, %v346, %v717
    %v738 = vsel %vm278, %v736, %v723
    %v739 = vsel %vm278, %v737, %v725
    %vm740 = vcmask 195584
    %v741 = vsel %vm740, %v738, %v731
    %v742 = vsel %vm740, %v739, %v733
    %v743 = vpack.c.bf16 %v742, %v741
    %v744 = vlaneseq
    %v745 = vshrl.u32 %v744, 7
    %v746 = vsub.s32 0, %v745
    %v747 = vrot.slane %v161, %v746
    %v752 = vunpack.c.l.b16 %v144
    %v753 = vunpack.c.l.b16 %v145
    %v754 = vunpack.c.l.b16 %v146
    %v755 = vunpack.c.l.b16 %v147
    %v756 = vpack.c.b16 %v753, %v752
    %v757 = vpack.c.b16 %v755, %v754
    %v761 = vsel %vm181, %v743, 0
    %763 = vmatprep.subr.bf16.mxu0 0
    %764 = vmatpush1.bf16.msra.mxu0 %v756
    %765 = vmatprep.subr.bf16.mxu0 0
    %766 = vmatpush1.bf16.msra.mxu0 %v757
    %767 = vmatprep.subr.bf16.mxu0 0
    %768 = vmatpush1.bf16.msra.mxu0 0
    %769 = vmatprep.subr.bf16.mxu0 0
    %770 = vmatpush1.bf16.msra.mxu0 0
    %771 = vmatprep.subr.bf16.mxu0 0
    %772 = vmatpush1.bf16.msra.mxu0 0
    %773 = vmatprep.subr.bf16.mxu0 0
    %774 = vmatpush1.bf16.msra.mxu0 0
    %775 = vmatprep.subr.bf16.mxu0 0
    %776 = vmatpush1.bf16.msra.mxu0 0
    %777 = vmatprep.subr.bf16.mxu0 0
    %778 = vmatpush1.bf16.msra.mxu0 0
    %779 = vmatprep.subr.bf16.mxu0 0
    %780 = vmatpush1.bf16.msra.mxu0 0
    %781 = vmatprep.subr.bf16.mxu0 0
    %782 = vmatpush1.bf16.msra.mxu0 0
    %783 = vmatprep.subr.bf16.mxu0 0
    %784 = vmatpush1.bf16.msra.mxu0 0
    %785 = vmatprep.subr.bf16.mxu0 0
    %786 = vmatpush1.bf16.msra.mxu0 0
    %787 = vmatprep.subr.bf16.mxu0 0
    %788 = vmatpush1.bf16.msra.mxu0 0
    %789 = vmatprep.subr.bf16.mxu0 0
    %790 = vmatpush1.bf16.msra.mxu0 0
    %791 = vmatprep.subr.bf16.mxu0 0
    %792 = vmatpush1.bf16.msra.mxu0 0
    %793 = vmatprep.subr.bf16.mxu0 0
    %794 = vmatpush1.bf16.msra.mxu0 0
    %795 = vmatprep.mubr.bf16.mxu0 0
    %796 = vmatmul.mubr.bf16.gmra.mrb[0].mxu0 %v761
    %v797 = vpop.f32.mrb[0].mxu0
    %v798 = vadd.f32 %v747, %v797
    %v799 = vpop.f32.mrb[0].mxu0
    %v800 = vpop.f32.mrb[0].mxu0
    %v801 = vadd.f32 %v747, %v800
    %v802 = vpop.f32.mrb[0].mxu0
    %803 = vdwg.mxu0
    %v804 = vadd.f32 %v131, %v798
    %v805 = vadd.f32 %v134, %v801
    %v806 = vsel %vm181, %v804, 0.0
    %807 = vadd.xlane.f32.xlu0 %v806
    %v808 = vpop.xlane.xlu0 %807
    %v809 = vsel %vm181, %v805, 0.0
    %810 = vadd.xlane.f32.xlu0 %v809
    %v811 = vpop.xlane.xlu0 %810
    %v812 = vrcp.pop 32.0
    %v813 = vmul.f32 %v808, %v812
    %v814 = vmul.f32 %v811, %v812
    %v815 = vsub.f32 %v804, %v813
    %v816 = vsub.f32 %v805, %v814
    %v817 = vmul.f32 %v815, %v815
    %v818 = vmul.f32 %v816, %v816
    %v819 = vsel %vm181, %v817, 0.0
    %820 = vadd.xlane.f32.xlu0 %v819
    %v821 = vpop.xlane.xlu0 %820
    %v822 = vsel %vm181, %v818, 0.0
    %823 = vadd.xlane.f32.xlu0 %v822
    %v824 = vpop.xlane.xlu0 %823
    %v825 = vmul.f32 %v821, %v812
    %v826 = vmul.f32 %v824, %v812
    %v827 = vadd.f32 %v825, 1e-05
    %v828 = vadd.f32 %v826, 1e-05
    %v829 = vrsqrt.pop %v827
    %v830 = vrsqrt.pop %v828
    %v831 = vmul.f32 %v815, %v829
    %v832 = vmul.f32 %v816, %v830
    %v833 = vlaneseq
    %v834 = vshrl.u32 %v833, 7
    %v835 = vsub.s32 1, %v834
    %v836 = vrot.slane %v161, %v835
    %v837 = vmul.f32 %v831, %v836
    %v838 = vmul.f32 %v832, %v836
    %v839 = vlaneseq
    %v840 = vshrl.u32 %v839, 7
    %v841 = vsub.s32 2, %v840
    %v842 = vrot.slane %v161, %v841
    %v843 = vadd.f32 %v837, %v842
    %v844 = vadd.f32 %v838, %v842
    %v845 = vpack.c.bf16 %v844, %v843
    %v847 = vlaneseq
    %v848 = vshrl.u32 %v847, 7
    %v849 = vsub.s32 0, %v848
    %v850 = vrot.slane %v152, %v849
    %v856 = vunpack.c.l.b16 %v148
    %v857 = vunpack.c.l.b16 %v149
    %v858 = vunpack.c.l.b16 %v150
    %v859 = vunpack.c.l.b16 %v151
    %v860 = vpack.c.b16 %v857, %v856
    %v861 = vpack.c.b16 %v859, %v858
    %v865 = vsel %vm181, %v845, 0
    %867 = vmatprep.subr.bf16.mxu0 0
    %868 = vmatpush1.bf16.msra.mxu0 %v860
    %869 = vmatprep.subr.bf16.mxu0 0
    %870 = vmatpush1.bf16.msra.mxu0 %v861
    %871 = vmatprep.subr.bf16.mxu0 0
    %872 = vmatpush1.bf16.msra.mxu0 0
    %873 = vmatprep.subr.bf16.mxu0 0
    %874 = vmatpush1.bf16.msra.mxu0 0
    %875 = vmatprep.subr.bf16.mxu0 0
    %876 = vmatpush1.bf16.msra.mxu0 0
    %877 = vmatprep.subr.bf16.mxu0 0
    %878 = vmatpush1.bf16.msra.mxu0 0
    %879 = vmatprep.subr.bf16.mxu0 0
    %880 = vmatpush1.bf16.msra.mxu0 0
    %881 = vmatprep.subr.bf16.mxu0 0
    %882 = vmatpush1.bf16.msra.mxu0 0
    %883 = vmatprep.subr.bf16.mxu0 0
    %884 = vmatpush1.bf16.msra.mxu0 0
    %885 = vmatprep.subr.bf16.mxu0 0
    %886 = vmatpush1.bf16.msra.mxu0 0
    %887 = vmatprep.subr.bf16.mxu0 0
    %888 = vmatpush1.bf16.msra.mxu0 0
    %889 = vmatprep.subr.bf16.mxu0 0
    %890 = vmatpush1.bf16.msra.mxu0 0
    %891 = vmatprep.subr.bf16.mxu0 0
    %892 = vmatpush1.bf16.msra.mxu0 0
    %893 = vmatprep.subr.bf16.mxu0 0
    %894 = vmatpush1.bf16.msra.mxu0 0
    %895 = vmatprep.subr.bf16.mxu0 0
    %896 = vmatpush1.bf16.msra.mxu0 0
    %897 = vmatprep.subr.bf16.mxu0 0
    %898 = vmatpush1.bf16.msra.mxu0 0
    %899 = vmatprep.mubr.bf16.mxu0 0
    %900 = vmatmul.mubr.bf16.gmra.mrb[0].mxu0 %v865
    %v901 = vpop.f32.mrb[0].mxu0
    %v902 = vadd.f32 %v850, %v901
    %v903 = vpop.f32.mrb[0].mxu0
    %v904 = vpop.f32.mrb[0].mxu0
    %v905 = vadd.f32 %v850, %v904
    %v906 = vpop.f32.mrb[0].mxu0
    %907 = vdwg.mxu0
    %v908 = vmul.f32 %v902, 0.5
    %v909 = vmul.f32 %v905, 0.5
    %v910 = vmul.f32 %v902, 0.70710677
    %v911 = vmul.f32 %v905, 0.70710677
    %v912 = verf.f32.pop %v910
    %v913 = verf.f32.pop %v911
    %v914 = vadd.f32 %v912, 1.0
    %v915 = vadd.f32 %v913, 1.0
    %v916 = vmul.f32 %v908, %v914
    %v917 = vmul.f32 %v909, %v915
    %v918 = vpack.c.bf16 %v917, %v916
    %v919 = vlaneseq
    %v920 = vshrl.u32 %v919, 7
    %v921 = vsub.s32 5, %v920
    %v922 = vrot.slane %v161, %v921
    %v931 = vunpack.c.l.b16 %v153
    %v932 = vunpack.c.l.b16 %v154
    %v933 = vunpack.c.l.b16 %v155
    %v934 = vunpack.c.l.b16 %v156
    %v935 = vunpack.c.l.b16 %v157
    %v936 = vunpack.c.l.b16 %v158
    %v937 = vunpack.c.l.b16 %v159
    %v938 = vunpack.c.l.b16 %v160
    %v939 = vpack.c.b16 %v932, %v931
    %v940 = vpack.c.b16 %v934, %v933
    %v941 = vpack.c.b16 %v936, %v935
    %v942 = vpack.c.b16 %v938, %v937
    %v948 = vsel %vm92, %v918, 0
    %950 = vmatprep.subr.bf16.mxu0 0
    %951 = vmatpush1.bf16.msra.mxu0 %v939
    %952 = vmatprep.subr.bf16.mxu0 0
    %953 = vmatpush1.bf16.msra.mxu0 %v940
    %954 = vmatprep.subr.bf16.mxu0 0
    %955 = vmatpush1.bf16.msra.mxu0 %v941
    %956 = vmatprep.subr.bf16.mxu0 0
    %957 = vmatpush1.bf16.msra.mxu0 %v942
    %958 = vmatprep.subr.bf16.mxu0 0
    %959 = vmatpush1.bf16.msra.mxu0 0
    %960 = vmatprep.subr.bf16.mxu0 0
    %961 = vmatpush1.bf16.msra.mxu0 0
    %962 = vmatprep.subr.bf16.mxu0 0
    %963 = vmatpush1.bf16.msra.mxu0 0
    %964 = vmatprep.subr.bf16.mxu0 0
    %965 = vmatpush1.bf16.msra.mxu0 0
    %966 = vmatprep.subr.bf16.mxu0 0
    %967 = vmatpush1.bf16.msra.mxu0 0
    %968 = vmatprep.subr.bf16.mxu0 0
    %969 = vmatpush1.bf16.msra.mxu0 0
    %970 = vmatprep.subr.bf16.mxu0 0
    %971 = vmatpush1.bf16.msra.mxu0 0
    %972 = vmatprep.subr.bf16.mxu0 0
    %973 = vmatpush1.bf16.msra.mxu0 0
    %974 = vmatprep.subr.bf16.mxu0 0
    %975 = vmatpush1.bf16.msra.mxu0 0
    %976 = vmatprep.subr.bf16.mxu0 0
    %977 = vmatpush1.bf16.msra.mxu0 0
    %978 = vmatprep.subr.bf16.mxu0 0
    %979 = vmatpush1.bf16.msra.mxu0 0
    %980 = vmatprep.subr.bf16.mxu0 0
    %981 = vmatpush1.bf16.msra.mxu0 0
    %982 = vmatprep.mubr.bf16.mxu0 0
    %983 = vmatmul.mubr.bf16.gmra.mrb[0].mxu0 %v948
    %v984 = vpop.f32.mrb[0].mxu0
    %v985 = vadd.f32 %v922, %v984
    %v986 = vpop.f32.mrb[0].mxu0
    %v987 = vpop.f32.mrb[0].mxu0
    %v988 = vadd.f32 %v922, %v987
    %v989 = vpop.f32.mrb[0].mxu0
    %990 = vdwg.mxu0
    %v991 = vadd.f32 %v843, %v985
    %v992 = vadd.f32 %v844, %v988
    %v993 = vsel %vm181, %v991, 0.0
    %994 = vadd.xlane.f32.xlu0 %v993
    %v995 = vpop.xlane.xlu0 %994
    %v996 = vsel %vm181, %v992, 0.0
    %997 = vadd.xlane.f32.xlu0 %v996
    %v998 = vpop.xlane.xlu0 %997
    %v999 = vmul.f32 %v995, %v812
    %v1000 = vmul.f32 %v998, %v812
    %v1001 = vsub.f32 %v991, %v999
    %v1002 = vsub.f32 %v992, %v1000
    %v1003 = vmul.f32 %v1001, %v1001
    %v1004 = vmul.f32 %v1002, %v1002
    %v1005 = vsel %vm181, %v1003, 0.0
    %1006 = vadd.xlane.f32.xlu0 %v1005
    %v1007 = vpop.xlane.xlu0 %1006
    %v1008 = vsel %vm181, %v1004, 0.0
    %1009 = vadd.xlane.f32.xlu0 %v1008
    %v1010 = vpop.xlane.xlu0 %1009
    %v1011 = vmul.f32 %v1007, %v812
    %v1012 = vmul.f32 %v1010, %v812
    %v1013 = vadd.f32 %v1011, 1e-05
    %v1014 = vadd.f32 %v1012, 1e-05
    %v1015 = vrsqrt.pop %v1013
    %v1016 = vrsqrt.pop %v1014
    %v1017 = vmul.f32 %v1001, %v1015
    %v1018 = vmul.f32 %v1002, %v1016
    %v1019 = vlaneseq
    %v1020 = vshrl.u32 %v1019, 7
    %v1021 = vsub.s32 3, %v1020
    %v1022 = vrot.slane %v161, %v1021
    %v1023 = vmul.f32 %v1017, %v1022
    %v1024 = vmul.f32 %v1018, %v1022
    %v1025 = vlaneseq
    %v1026 = vshrl.u32 %v1025, 7
    %v1027 = vsub.s32 4, %v1026
    %v1028 = vrot.slane %v161, %v1027
    %v1029 = vadd.f32 %v1023, %v1028
    %v1030 = vadd.f32 %v1024, %v1028
    %s1031 = scalar_lea.vmem %s4, 16
    %v1032 = vld [vmem:[%s1031] sm:$0xf]
    %v1033 = vld [vmem:[%s1031 + $0x4] sm:$0xf]
    %v1034 = vld [vmem:[%s1031 + $0x8] sm:$0xf]
    %v1035 = vld [vmem:[%s1031 + $0xc] sm:$0xf]
    %s1036 = scalar_lea.vmem %s5, 1
    %v1037 = vld [vmem:[%s1036] sm:$0x1]
    %s1038 = scalar_lea.vmem %s6, 16
    %v1039 = vld [vmem:[%s1038] sm:$0xf]
    %v1040 = vld [vmem:[%s1038 + $0x4] sm:$0xf]
    %v1041 = vld [vmem:[%s1038 + $0x8] sm:$0xf]
    %v1042 = vld [vmem:[%s1038 + $0xc] sm:$0xf]
    %s1043 = scalar_lea.vmem %s7, 16
    %v1044 = vld [vmem:[%s1043] sm:$0xf]
    %v1045 = vld [vmem:[%s1043 + $0x4] sm:$0xf]
    %v1046 = vld [vmem:[%s1043 + $0x8] sm:$0xf]
    %v1047 = vld [vmem:[%s1043 + $0xc] sm:$0xf]
    %s1048 = scalar_lea.vmem %s8, 1
    %v1049 = vld [vmem:[%s1048] sm:$0x1]
    %s1050 = scalar_lea.vmem %s9, 32
    %v1051 = vld [vmem:[%s1050] sm:$0xf]
    %v1052 = vld [vmem:[%s1050 + $0x4] sm:$0xf]
    %v1053 = vld [vmem:[%s1050 + $0x8] sm:$0xf]
    %v1054 = vld [vmem:[%s1050 + $0xc] sm:$0xf]
    %v1055 = vld [vmem:[%s1050 + $0x10] sm:$0xf]
    %v1056 = vld [vmem:[%s1050 + $0x14] sm:$0xf]
    %v1057 = vld [vmem:[%s1050 + $0x18] sm:$0xf]
    %v1058 = vld [vmem:[%s1050 + $0x1c] sm:$0xf]
    %s1059 = scalar_lea.vmem %s10, 8
    %v1060 = vld [vmem:[%s1059] sm:$0x3f]
    %v1061 = vpack.c.bf16 %v1030, %v1029
    %v1063 = vlaneseq
    %v1064 = vshrl.u32 %v1063, 7
    %v1065 = vsub.s32 0, %v1064
    %v1066 = vrot.slane %v1037, %v1065
    %v1072 = vunpack.c.l.b16 %v1032
    %v1073 = vunpack.c.l.b16 %v1033
    %v1074 = vunpack.c.l.b16 %v1034
    %v1075 = vunpack.c.l.b16 %v1035
    %v1076 = vpack.c.b16 %v1073, %v1072
    %v1077 = vpack.c.b16 %v1075, %v1074
    %v1081 = vsel %vm181, %v1061, 0
    %1083 = vmatprep.subr.bf16.mxu0 0
    %1084 = vmatpush1.bf16.msra.mxu0 %v1076
    %1085 = vmatprep.subr.bf16.mxu0 0
    %1086 = vmatpush1.bf16.msra.mxu0 %v1077
    %1087 = vmatprep.subr.bf16.mxu0 0
    %1088 = vmatpush1.bf16.msra.mxu0 0
    %1089 = vmatprep.subr.bf16.mxu0 0
    %1090 = vmatpush1.bf16.msra.mxu0 0
    %1091 = vmatprep.subr.bf16.mxu0 0
    %1092 = vmatpush1.bf16.msra.mxu0 0
    %1093 = vmatprep.subr.bf16.mxu0 0
    %1094 = vmatpush1.bf16.msra.mxu0 0
    %1095 = vmatprep.subr.bf16.mxu0 0
    %1096 = vmatpush1.bf16.msra.mxu0 0
    %1097 = vmatprep.subr.bf16.mxu0 0
    %1098 = vmatpush1.bf16.msra.mxu0 0
    %1099 = vmatprep.subr.bf16.mxu0 0
    %1100 = vmatpush1.bf16.msra.mxu0 0
    %1101 = vmatprep.subr.bf16.mxu0 0
    %1102 = vmatpush1.bf16.msra.mxu0 0
    %1103 = vmatprep.subr.bf16.mxu0 0
    %1104 = vmatpush1.bf16.msra.mxu0 0
    %1105 = vmatprep.subr.bf16.mxu0 0
    %1106 = vmatpush1.bf16.msra.mxu0 0
    %1107 = vmatprep.subr.bf16.mxu0 0
    %1108 = vmatpush1.bf16.msra.mxu0 0
    %1109 = vmatprep.subr.bf16.mxu0 0
    %1110 = vmatpush1.bf16.msra.mxu0 0
    %1111 = vmatprep.subr.bf16.mxu0 0
    %1112 = vmatpush1.bf16.msra.mxu0 0
    %1113 = vmatprep.subr.bf16.mxu0 0
    %1114 = vmatpush1.bf16.msra.mxu0 0
    %1115 = vmatprep.mubr.bf16.mxu0 0
    %1116 = vmatmul.mubr.bf16.gmra.mrb[0].mxu0 %v1081
    %v1117 = vpop.f32.mrb[0].mxu0
    %v1118 = vadd.f32 %v1066, %v1117
    %v1119 = vpop.f32.mrb[0].mxu0
    %v1120 = vpop.f32.mrb[0].mxu0
    %v1121 = vadd.f32 %v1066, %v1120
    %v1122 = vpop.f32.mrb[0].mxu0
    %1123 = vdwg.mxu0
    %v1124 = vpack.c.bf16 %v1121, %v1118
    %1126 = vrot.lane.b32.xlu0 %v1124, 96
    %v1127 = vpop.permute.xlu0 %1126
    %v1129 = vsel %vm230, %v1124, 0
    %v1132 = vsel %vm230, %v1127, 0
    %1134 = vmatprep.subr.bf16.mxu0 0
    %1135 = vmatpush1.bf16.xpose.msra.mxu0 %v1132
    %1136 = vmatprep.subr.bf16.mxu0 0
    %1137 = vmatpush1.bf16.xpose.msra.mxu0 0
    %1138 = vmatprep.subr.bf16.mxu0 0
    %1139 = vmatpush1.bf16.xpose.msra.mxu0 0
    %1140 = vmatprep.subr.bf16.mxu0 0
    %1141 = vmatpush1.bf16.xpose.msra.mxu0 0
    %1142 = vmatprep.subr.bf16.mxu0 0
    %1143 = vmatpush1.bf16.xpose.msra.mxu0 0
    %1144 = vmatprep.subr.bf16.mxu0 0
    %1145 = vmatpush1.bf16.xpose.msra.mxu0 0
    %1146 = vmatprep.subr.bf16.mxu0 0
    %1147 = vmatpush1.bf16.xpose.msra.mxu0 0
    %1148 = vmatprep.subr.bf16.mxu0 0
    %1149 = vmatpush1.bf16.xpose.msra.mxu0 0
    %1150 = vmatprep.subr.bf16.mxu0 0
    %1151 = vmatpush1.bf16.xpose.msra.mxu0 0
    %1152 = vmatprep.subr.bf16.mxu0 0
    %1153 = vmatpush1.bf16.xpose.msra.mxu0 0
    %1154 = vmatprep.subr.bf16.mxu0 0
    %1155 = vmatpush1.bf16.xpose.msra.mxu0 0
    %1156 = vmatprep.subr.bf16.mxu0 0
    %1157 = vmatpush1.bf16.xpose.msra.mxu0 0
    %1158 = vmatprep.subr.bf16.mxu0 0
    %1159 = vmatpush1.bf16.xpose.msra.mxu0 0
    %1160 = vmatprep.subr.bf16.mxu0 0
    %1161 = vmatpush1.bf16.xpose.msra.mxu0 0
    %1162 = vmatprep.subr.bf16.mxu0 0
    %1163 = vmatpush1.bf16.xpose.msra.mxu0 0
    %1164 = vmatprep.subr.bf16.mxu0 0
    %1165 = vmatpush1.bf16.xpose.msra.mxu0 0
    %1166 = vmatprep.mubr.bf16.mxu0 0
    %1167 = vmatmul.mubr.bf16.gmra.mrb[0].mxu0 %v1129
    %v1168 = vpop.f32.mrb[0].mxu0
    %v1169 = vadd.f32 %v137, %v1168
    %v1170 = vpop.f32.mrb[0].mxu0
    %v1171 = vpop.f32.mrb[0].mxu0
    %v1172 = vadd.f32 %v138, %v1171
    %v1173 = vpop.f32.mrb[0].mxu0
    %1174 = vdwg.mxu0
    %v1175 = vsel %vm278, %v1169, -inf
    %1176 = vmax.xlane.f32.xlu0 %v1175
    %v1177 = vpop.xlane.xlu0 %1176
    %v1178 = vsel %vm278, %v1172, -inf
    %1179 = vmax.xlane.f32.xlu0 %v1178
    %v1180 = vpop.xlane.xlu0 %1179
    %v1181 = vsub.f32 %v1169, %v1177
    %v1182 = vsub.f32 %v1172, %v1180
    %v1183 = vmul.f32 %v1181, 1.442695
    %v1184 = vpow.pop %v1183
    %v1185 = vmul.f32 %v1182, 1.442695
    %v1186 = vpow.pop %v1185
    %v1187 = vsel %vm278, %v1184, 0.0
    %1188 = vadd.xlane.f32.xlu0 %v1187
    %v1189 = vpop.xlane.xlu0 %1188
    %v1190 = vsel %vm278, %v1186, 0.0
    %1191 = vadd.xlane.f32.xlu0 %v1190
    %v1192 = vpop.xlane.xlu0 %1191
    %v1193 = vrcp.pop %v1189
    %v1194 = vrcp.pop %v1192
    %v1195 = vmul.f32 %v1184, %v1193
    %v1196 = vmul.f32 %v1186, %v1194
    %v1197 = vpack.c.bf16 %v1196, %v1195
    %1198 = vrot.lane.b32.xlu0 %v1124, 64
    %v1199 = vpop.permute.xlu0 %1198
    %v1202 = vsel %vm278, %v1197, 0
    %1204 = vmatprep.subr.bf16.mxu0 0
    %1205 = vmatpush1.bf16.msra.mxu0 %v1199
    %1206 = vmatprep.subr.bf16.mxu0 0
    %1207 = vmatpush1.bf16.msra.mxu0 0
    %1208 = vmatprep.subr.bf16.mxu0 0
    %1209 = vmatpush1.bf16.msra.mxu0 0
    %1210 = vmatprep.subr.bf16.mxu0 0
    %1211 = vmatpush1.bf16.msra.mxu0 0
    %1212 = vmatprep.subr.bf16.mxu0 0
    %1213 = vmatpush1.bf16.msra.mxu0 0
    %1214 = vmatprep.subr.bf16.mxu0 0
    %1215 = vmatpush1.bf16.msra.mxu0 0
    %1216 = vmatprep.subr.bf16.mxu0 0
    %1217 = vmatpush1.bf16.msra.mxu0 0
    %1218 = vmatprep.subr.bf16.mxu0 0
    %1219 = vmatpush1.bf16.msra.mxu0 0
    %1220 = vmatprep.subr.bf16.mxu0 0
    %1221 = vmatpush1.bf16.msra.mxu0 0
    %1222 = vmatprep.subr.bf16.mxu0 0
    %1223 = vmatpush1.bf16.msra.mxu0 0
    %1224 = vmatprep.subr.bf16.mxu0 0
    %1225 = vmatpush1.bf16.msra.mxu0 0
    %1226 = vmatprep.subr.bf16.mxu0 0
    %1227 = vmatpush1.bf16.msra.mxu0 0
    %1228 = vmatprep.subr.bf16.mxu0 0
    %1229 = vmatpush1.bf16.msra.mxu0 0
    %1230 = vmatprep.subr.bf16.mxu0 0
    %1231 = vmatpush1.bf16.msra.mxu0 0
    %1232 = vmatprep.subr.bf16.mxu0 0
    %1233 = vmatpush1.bf16.msra.mxu0 0
    %1234 = vmatprep.subr.bf16.mxu0 0
    %1235 = vmatpush1.bf16.msra.mxu0 0
    %1236 = vmatprep.mubr.bf16.mxu0 0
    %1237 = vmatmul.mubr.bf16.gmra.mrb[0].mxu0 %v1202
    %v1238 = vpop.f32.mrb[0].mxu0
    %v1239 = vadd.f32 0.0, %v1238
    %v1240 = vpop.f32.mrb[0].mxu0
    %v1241 = vpop.f32.mrb[0].mxu0
    %v1242 = vadd.f32 0.0, %v1241
    %v1243 = vpop.f32.mrb[0].mxu0
    %1244 = vdwg.mxu0
    %1245 = vrot.lane.b32.xlu0 %v1124, 120
    %v1246 = vpop.permute.xlu0 %1245
    %1247 = vrot.lane.b32.xlu0 %v1124, 88
    %v1248 = vpop.permute.xlu0 %1247
    %v1250 = vsel %vm230, %v1246, 0
    %v1253 = vsel %vm230, %v1248, 0
    %1255 = vmatprep.subr.bf16.mxu0 0
    %1256 = vmatpush1.bf16.xpose.msra.mxu0 %v1253
    %1257 = vmatprep.subr.bf16.mxu0 0
    %1258 = vmatpush1.bf16.xpose.msra.mxu0 0
    %1259 = vmatprep.subr.bf16.mxu0 0
    %1260 = vmatpush1.bf16.xpose.msra.mxu0 0
    %1261 = vmatprep.subr.bf16.mxu0 0
    %1262 = vmatpush1.bf16.xpose.msra.mxu0 0
    %1263 = vmatprep.subr.bf16.mxu0 0
    %1264 = vmatpush1.bf16.xpose.msra.mxu0 0
    %1265 = vmatprep.subr.bf16.mxu0 0
    %1266 = vmatpush1.bf16.xpose.msra.mxu0 0
    %1267 = vmatprep.subr.bf16.mxu0 0
    %1268 = vmatpush1.bf16.xpose.msra.mxu0 0
    %1269 = vmatprep.subr.bf16.mxu0 0
    %1270 = vmatpush1.bf16.xpose.msra.mxu0 0
    %1271 = vmatprep.subr.bf16.mxu0 0
    %1272 = vmatpush1.bf16.xpose.msra.mxu0 0
    %1273 = vmatprep.subr.bf16.mxu0 0
    %1274 = vmatpush1.bf16.xpose.msra.mxu0 0
    %1275 = vmatprep.subr.bf16.mxu0 0
    %1276 = vmatpush1.bf16.xpose.msra.mxu0 0
    %1277 = vmatprep.subr.bf16.mxu0 0
    %1278 = vmatpush1.bf16.xpose.msra.mxu0 0
    %1279 = vmatprep.subr.bf16.mxu0 0
    %1280 = vmatpush1.bf16.xpose.msra.mxu0 0
    %1281 = vmatprep.subr.bf16.mxu0 0
    %1282 = vmatpush1.bf16.xpose.msra.mxu0 0
    %1283 = vmatprep.subr.bf16.mxu0 0
    %1284 = vmatpush1.bf16.xpose.msra.mxu0 0
    %1285 = vmatprep.subr.bf16.mxu0 0
    %1286 = vmatpush1.bf16.xpose.msra.mxu0 0
    %1287 = vmatprep.mubr.bf16.mxu0 0
    %1288 = vmatmul.mubr.bf16.gmra.mrb[0].mxu0 %v1250
    %v1289 = vpop.f32.mrb[0].mxu0
    %v1290 = vadd.f32 %v137, %v1289
    %v1291 = vpop.f32.mrb[0].mxu0
    %v1292 = vpop.f32.mrb[0].mxu0
    %v1293 = vadd.f32 %v138, %v1292
    %v1294 = vpop.f32.mrb[0].mxu0
    %1295 = vdwg.mxu0
    %v1296 = vsel %vm278, %v1290, -inf
    %1297 = vmax.xlane.f32.xlu0 %v1296
    %v1298 = vpop.xlane.xlu0 %1297
    %v1299 = vsel %vm278, %v1293, -inf
    %1300 = vmax.xlane.f32.xlu0 %v1299
    %v1301 = vpop.xlane.xlu0 %1300
    %v1302 = vsub.f32 %v1290, %v1298
    %v1303 = vsub.f32 %v1293, %v1301
    %v1304 = vmul.f32 %v1302, 1.442695
    %v1305 = vpow.pop %v1304
    %v1306 = vmul.f32 %v1303, 1.442695
    %v1307 = vpow.pop %v1306
    %v1308 = vsel %vm278, %v1305, 0.0
    %1309 = vadd.xlane.f32.xlu0 %v1308
    %v1310 = vpop.xlane.xlu0 %1309
    %v1311 = vsel %vm278, %v1307, 0.0
    %1312 = vadd.xlane.f32.xlu0 %v1311
    %v1313 = vpop.xlane.xlu0 %1312
    %v1314 = vrcp.pop %v1310
    %v1315 = vrcp.pop %v1313
    %v1316 = vmul.f32 %v1305, %v1314
    %v1317 = vmul.f32 %v1307, %v1315
    %v1318 = vpack.c.bf16 %v1317, %v1316
    %1319 = vrot.lane.b32.xlu0 %v1124, 56
    %v1320 = vpop.permute.xlu0 %1319
    %v1323 = vsel %vm278, %v1318, 0
    %1325 = vmatprep.subr.bf16.mxu0 0
    %1326 = vmatpush1.bf16.msra.mxu0 %v1320
    %1327 = vmatprep.subr.bf16.mxu0 0
    %1328 = vmatpush1.bf16.msra.mxu0 0
    %1329 = vmatprep.subr.bf16.mxu0 0
    %1330 = vmatpush1.bf16.msra.mxu0 0
    %1331 = vmatprep.subr.bf16.mxu0 0
    %1332 = vmatpush1.bf16.msra.mxu0 0
    %1333 = vmatprep.subr.bf16.mxu0 0
    %1334 = vmatpush1.bf16.msra.mxu0 0
    %1335 = vmatprep.subr.bf16.mxu0 0
    %1336 = vmatpush1.bf16.msra.mxu0 0
    %1337 = vmatprep.subr.bf16.mxu0 0
    %1338 = vmatpush1.bf16.msra.mxu0 0
    %1339 = vmatprep.subr.bf16.mxu0 0
    %1340 = vmatpush1.bf16.msra.mxu0 0
    %1341 = vmatprep.subr.bf16.mxu0 0
    %1342 = vmatpush1.bf16.msra.mxu0 0
    %1343 = vmatprep.subr.bf16.mxu0 0
    %1344 = vmatpush1.bf16.msra.mxu0 0
    %1345 = vmatprep.subr.bf16.mxu0 0
    %1346 = vmatpush1.bf16.msra.mxu0 0
    %1347 = vmatprep.subr.bf16.mxu0 0
    %1348 = vmatpush1.bf16.msra.mxu0 0
    %1349 = vmatprep.subr.bf16.mxu0 0
    %1350 = vmatpush1.bf16.msra.mxu0 0
    %1351 = vmatprep.subr.bf16.mxu0 0
    %1352 = vmatpush1.bf16.msra.mxu0 0
    %1353 = vmatprep.subr.bf16.mxu0 0
    %1354 = vmatpush1.bf16.msra.mxu0 0
    %1355 = vmatprep.subr.bf16.mxu0 0
    %1356 = vmatpush1.bf16.msra.mxu0 0
    %1357 = vmatprep.mubr.bf16.mxu0 0
    %1358 = vmatmul.mubr.bf16.gmra.mrb[0].mxu0 %v1323
    %v1359 = vpop.f32.mrb[0].mxu0
    %v1360 = vadd.f32 0.0, %v1359
    %v1361 = vpop.f32.mrb[0].mxu0
    %v1362 = vpop.f32.mrb[0].mxu0
    %v1363 = vadd.f32 0.0, %v1362
    %v1364 = vpop.f32.mrb[0].mxu0
    %1365 = vdwg.mxu0
    %1366 = vrot.lane.b32.xlu0 %v1124, 112
    %v1367 = vpop.permute.xlu0 %1366
    %1368 = vrot.lane.b32.xlu0 %v1124, 80
    %v1369 = vpop.permute.xlu0 %1368
    %v1371 = vsel %vm230, %v1367, 0
    %v1374 = vsel %vm230, %v1369, 0
    %1376 = vmatprep.subr.bf16.mxu0 0
    %1377 = vmatpush1.bf16.xpose.msra.mxu0 %v1374
    %1378 = vmatprep.subr.bf16.mxu0 0
    %1379 = vmatpush1.bf16.xpose.msra.mxu0 0
    %1380 = vmatprep.subr.bf16.mxu0 0
    %1381 = vmatpush1.bf16.xpose.msra.mxu0 0
    %1382 = vmatprep.subr.bf16.mxu0 0
    %1383 = vmatpush1.bf16.xpose.msra.mxu0 0
    %1384 = vmatprep.subr.bf16.mxu0 0
    %1385 = vmatpush1.bf16.xpose.msra.mxu0 0
    %1386 = vmatprep.subr.bf16.mxu0 0
    %1387 = vmatpush1.bf16.xpose.msra.mxu0 0
    %1388 = vmatprep.subr.bf16.mxu0 0
    %1389 = vmatpush1.bf16.xpose.msra.mxu0 0
    %1390 = vmatprep.subr.bf16.mxu0 0
    %1391 = vmatpush1.bf16.xpose.msra.mxu0 0
    %1392 = vmatprep.subr.bf16.mxu0 0
    %1393 = vmatpush1.bf16.xpose.msra.mxu0 0
    %1394 = vmatprep.subr.bf16.mxu0 0
    %1395 = vmatpush1.bf16.xpose.msra.mxu0 0
    %1396 = vmatprep.subr.bf16.mxu0 0
    %1397 = vmatpush1.bf16.xpose.msra.mxu0 0
    %1398 = vmatprep.subr.bf16.mxu0 0
    %1399 = vmatpush1.bf16.xpose.msra.mxu0 0
    %1400 = vmatprep.subr.bf16.mxu0 0
    %1401 = vmatpush1.bf16.xpose.msra.mxu0 0
    %1402 = vmatprep.subr.bf16.mxu0 0
    %1403 = vmatpush1.bf16.xpose.msra.mxu0 0
    %1404 = vmatprep.subr.bf16.mxu0 0
    %1405 = vmatpush1.bf16.xpose.msra.mxu0 0
    %1406 = vmatprep.subr.bf16.mxu0 0
    %1407 = vmatpush1.bf16.xpose.msra.mxu0 0
    %1408 = vmatprep.mubr.bf16.mxu0 0
    %1409 = vmatmul.mubr.bf16.gmra.mrb[0].mxu0 %v1371
    %v1410 = vpop.f32.mrb[0].mxu0
    %v1411 = vadd.f32 %v137, %v1410
    %v1412 = vpop.f32.mrb[0].mxu0
    %v1413 = vpop.f32.mrb[0].mxu0
    %v1414 = vadd.f32 %v138, %v1413
    %v1415 = vpop.f32.mrb[0].mxu0
    %1416 = vdwg.mxu0
    %v1417 = vsel %vm278, %v1411, -inf
    %1418 = vmax.xlane.f32.xlu0 %v1417
    %v1419 = vpop.xlane.xlu0 %1418
    %v1420 = vsel %vm278, %v1414, -inf
    %1421 = vmax.xlane.f32.xlu0 %v1420
    %v1422 = vpop.xlane.xlu0 %1421
    %v1423 = vsub.f32 %v1411, %v1419
    %v1424 = vsub.f32 %v1414, %v1422
    %v1425 = vmul.f32 %v1423, 1.442695
    %v1426 = vpow.pop %v1425
    %v1427 = vmul.f32 %v1424, 1.442695
    %v1428 = vpow.pop %v1427
    %v1429 = vsel %vm278, %v1426, 0.0
    %1430 = vadd.xlane.f32.xlu0 %v1429
    %v1431 = vpop.xlane.xlu0 %1430
    %v1432 = vsel %vm278, %v1428, 0.0
    %1433 = vadd.xlane.f32.xlu0 %v1432
    %v1434 = vpop.xlane.xlu0 %1433
    %v1435 = vrcp.pop %v1431
    %v1436 = vrcp.pop %v1434
    %v1437 = vmul.f32 %v1426, %v1435
    %v1438 = vmul.f32 %v1428, %v1436
    %v1439 = vpack.c.bf16 %v1438, %v1437
    %1440 = vrot.lane.b32.xlu0 %v1124, 48
    %v1441 = vpop.permute.xlu0 %1440
    %v1444 = vsel %vm278, %v1439, 0
    %1446 = vmatprep.subr.bf16.mxu0 0
    %1447 = vmatpush1.bf16.msra.mxu0 %v1441
    %1448 = vmatprep.subr.bf16.mxu0 0
    %1449 = vmatpush1.bf16.msra.mxu0 0
    %1450 = vmatprep.subr.bf16.mxu0 0
    %1451 = vmatpush1.bf16.msra.mxu0 0
    %1452 = vmatprep.subr.bf16.mxu0 0
    %1453 = vmatpush1.bf16.msra.mxu0 0
    %1454 = vmatprep.subr.bf16.mxu0 0
    %1455 = vmatpush1.bf16.msra.mxu0 0
    %1456 = vmatprep.subr.bf16.mxu0 0
    %1457 = vmatpush1.bf16.msra.mxu0 0
    %1458 = vmatprep.subr.bf16.mxu0 0
    %1459 = vmatpush1.bf16.msra.mxu0 0
    %1460 = vmatprep.subr.bf16.mxu0 0
    %1461 = vmatpush1.bf16.msra.mxu0 0
    %1462 = vmatprep.subr.bf16.mxu0 0
    %1463 = vmatpush1.bf16.msra.mxu0 0
    %1464 = vmatprep.subr.bf16.mxu0 0
    %1465 = vmatpush1.bf16.msra.mxu0 0
    %1466 = vmatprep.subr.bf16.mxu0 0
    %1467 = vmatpush1.bf16.msra.mxu0 0
    %1468 = vmatprep.subr.bf16.mxu0 0
    %1469 = vmatpush1.bf16.msra.mxu0 0
    %1470 = vmatprep.subr.bf16.mxu0 0
    %1471 = vmatpush1.bf16.msra.mxu0 0
    %1472 = vmatprep.subr.bf16.mxu0 0
    %1473 = vmatpush1.bf16.msra.mxu0 0
    %1474 = vmatprep.subr.bf16.mxu0 0
    %1475 = vmatpush1.bf16.msra.mxu0 0
    %1476 = vmatprep.subr.bf16.mxu0 0
    %1477 = vmatpush1.bf16.msra.mxu0 0
    %1478 = vmatprep.mubr.bf16.mxu0 0
    %1479 = vmatmul.mubr.bf16.gmra.mrb[0].mxu0 %v1444
    %v1480 = vpop.f32.mrb[0].mxu0
    %v1481 = vadd.f32 0.0, %v1480
    %v1482 = vpop.f32.mrb[0].mxu0
    %v1483 = vpop.f32.mrb[0].mxu0
    %v1484 = vadd.f32 0.0, %v1483
    %v1485 = vpop.f32.mrb[0].mxu0
    %1486 = vdwg.mxu0
    %1487 = vrot.lane.b32.xlu0 %v1124, 104
    %v1488 = vpop.permute.xlu0 %1487
    %1489 = vrot.lane.b32.xlu0 %v1124, 72
    %v1490 = vpop.permute.xlu0 %1489
    %v1492 = vsel %vm230, %v1488, 0
    %v1495 = vsel %vm230, %v1490, 0
    %1497 = vmatprep.subr.bf16.mxu0 0
    %1498 = vmatpush1.bf16.xpose.msra.mxu0 %v1495
    %1499 = vmatprep.subr.bf16.mxu0 0
    %1500 = vmatpush1.bf16.xpose.msra.mxu0 0
    %1501 = vmatprep.subr.bf16.mxu0 0
    %1502 = vmatpush1.bf16.xpose.msra.mxu0 0
    %1503 = vmatprep.subr.bf16.mxu0 0
    %1504 = vmatpush1.bf16.xpose.msra.mxu0 0
    %1505 = vmatprep.subr.bf16.mxu0 0
    %1506 = vmatpush1.bf16.xpose.msra.mxu0 0
    %1507 = vmatprep.subr.bf16.mxu0 0
    %1508 = vmatpush1.bf16.xpose.msra.mxu0 0
    %1509 = vmatprep.subr.bf16.mxu0 0
    %1510 = vmatpush1.bf16.xpose.msra.mxu0 0
    %1511 = vmatprep.subr.bf16.mxu0 0
    %1512 = vmatpush1.bf16.xpose.msra.mxu0 0
    %1513 = vmatprep.subr.bf16.mxu0 0
    %1514 = vmatpush1.bf16.xpose.msra.mxu0 0
    %1515 = vmatprep.subr.bf16.mxu0 0
    %1516 = vmatpush1.bf16.xpose.msra.mxu0 0
    %1517 = vmatprep.subr.bf16.mxu0 0
    %1518 = vmatpush1.bf16.xpose.msra.mxu0 0
    %1519 = vmatprep.subr.bf16.mxu0 0
    %1520 = vmatpush1.bf16.xpose.msra.mxu0 0
    %1521 = vmatprep.subr.bf16.mxu0 0
    %1522 = vmatpush1.bf16.xpose.msra.mxu0 0
    %1523 = vmatprep.subr.bf16.mxu0 0
    %1524 = vmatpush1.bf16.xpose.msra.mxu0 0
    %1525 = vmatprep.subr.bf16.mxu0 0
    %1526 = vmatpush1.bf16.xpose.msra.mxu0 0
    %1527 = vmatprep.subr.bf16.mxu0 0
    %1528 = vmatpush1.bf16.xpose.msra.mxu0 0
    %1529 = vmatprep.mubr.bf16.mxu0 0
    %1530 = vmatmul.mubr.bf16.gmra.mrb[0].mxu0 %v1492
    %v1531 = vpop.f32.mrb[0].mxu0
    %v1532 = vadd.f32 %v137, %v1531
    %v1533 = vpop.f32.mrb[0].mxu0
    %v1534 = vpop.f32.mrb[0].mxu0
    %v1535 = vadd.f32 %v138, %v1534
    %v1536 = vpop.f32.mrb[0].mxu0
    %1537 = vdwg.mxu0
    %v1538 = vsel %vm278, %v1532, -inf
    %1539 = vmax.xlane.f32.xlu0 %v1538
    %v1540 = vpop.xlane.xlu0 %1539
    %v1541 = vsel %vm278, %v1535, -inf
    %1542 = vmax.xlane.f32.xlu0 %v1541
    %v1543 = vpop.xlane.xlu0 %1542
    %v1544 = vsub.f32 %v1532, %v1540
    %v1545 = vsub.f32 %v1535, %v1543
    %v1546 = vmul.f32 %v1544, 1.442695
    %v1547 = vpow.pop %v1546
    %v1548 = vmul.f32 %v1545, 1.442695
    %v1549 = vpow.pop %v1548
    %v1550 = vsel %vm278, %v1547, 0.0
    %1551 = vadd.xlane.f32.xlu0 %v1550
    %v1552 = vpop.xlane.xlu0 %1551
    %v1553 = vsel %vm278, %v1549, 0.0
    %1554 = vadd.xlane.f32.xlu0 %v1553
    %v1555 = vpop.xlane.xlu0 %1554
    %v1556 = vrcp.pop %v1552
    %v1557 = vrcp.pop %v1555
    %v1558 = vmul.f32 %v1547, %v1556
    %v1559 = vmul.f32 %v1549, %v1557
    %v1560 = vpack.c.bf16 %v1559, %v1558
    %1561 = vrot.lane.b32.xlu0 %v1124, 40
    %v1562 = vpop.permute.xlu0 %1561
    %v1565 = vsel %vm278, %v1560, 0
    %1567 = vmatprep.subr.bf16.mxu0 0
    %1568 = vmatpush1.bf16.msra.mxu0 %v1562
    %1569 = vmatprep.subr.bf16.mxu0 0
    %1570 = vmatpush1.bf16.msra.mxu0 0
    %1571 = vmatprep.subr.bf16.mxu0 0
    %1572 = vmatpush1.bf16.msra.mxu0 0
    %1573 = vmatprep.subr.bf16.mxu0 0
    %1574 = vmatpush1.bf16.msra.mxu0 0
    %1575 = vmatprep.subr.bf16.mxu0 0
    %1576 = vmatpush1.bf16.msra.mxu0 0
    %1577 = vmatprep.subr.bf16.mxu0 0
    %1578 = vmatpush1.bf16.msra.mxu0 0
    %1579 = vmatprep.subr.bf16.mxu0 0
    %1580 = vmatpush1.bf16.msra.mxu0 0
    %1581 = vmatprep.subr.bf16.mxu0 0
    %1582 = vmatpush1.bf16.msra.mxu0 0
    %1583 = vmatprep.subr.bf16.mxu0 0
    %1584 = vmatpush1.bf16.msra.mxu0 0
    %1585 = vmatprep.subr.bf16.mxu0 0
    %1586 = vmatpush1.bf16.msra.mxu0 0
    %1587 = vmatprep.subr.bf16.mxu0 0
    %1588 = vmatpush1.bf16.msra.mxu0 0
    %1589 = vmatprep.subr.bf16.mxu0 0
    %1590 = vmatpush1.bf16.msra.mxu0 0
    %1591 = vmatprep.subr.bf16.mxu0 0
    %1592 = vmatpush1.bf16.msra.mxu0 0
    %1593 = vmatprep.subr.bf16.mxu0 0
    %1594 = vmatpush1.bf16.msra.mxu0 0
    %1595 = vmatprep.subr.bf16.mxu0 0
    %1596 = vmatpush1.bf16.msra.mxu0 0
    %1597 = vmatprep.subr.bf16.mxu0 0
    %1598 = vmatpush1.bf16.msra.mxu0 0
    %1599 = vmatprep.mubr.bf16.mxu0 0
    %1600 = vmatmul.mubr.bf16.gmra.mrb[0].mxu0 %v1565
    %v1601 = vpop.f32.mrb[0].mxu0
    %v1602 = vadd.f32 0.0, %v1601
    %v1603 = vpop.f32.mrb[0].mxu0
    %v1604 = vpop.f32.mrb[0].mxu0
    %v1605 = vadd.f32 0.0, %v1604
    %v1606 = vpop.f32.mrb[0].mxu0
    %1607 = vdwg.mxu0
    %1610 = vrot.lane.b32.xlu0 %v1360, 8
    %v1611 = vpop.permute.xlu0 %1610
    %1612 = vrot.lane.b32.xlu0 %v1363, 8
    %v1613 = vpop.permute.xlu0 %1612
    %1618 = vrot.lane.b32.xlu0 %v1481, 16
    %v1619 = vpop.permute.xlu0 %1618
    %1620 = vrot.lane.b32.xlu0 %v1484, 16
    %v1621 = vpop.permute.xlu0 %1620
    %1626 = vrot.lane.b32.xlu0 %v1602, 24
    %v1627 = vpop.permute.xlu0 %1626
    %1628 = vrot.lane.b32.xlu0 %v1605, 24
    %v1629 = vpop.permute.xlu0 %1628
    %v1632 = vsel %vm230, %v1239, %v1611
    %v1633 = vsel %vm230, %v1242, %v1613
    %v1634 = vsel %vm278, %v1632, %v1619
    %v1635 = vsel %vm278, %v1633, %v1621
    %v1636 = vsel %vm740, %v1634, %v1627
    %v1637 = vsel %vm740, %v1635, %v1629
    %v1638 = vpack.c.bf16 %v1637, %v1636
    %v1639 = vlaneseq
    %v1640 = vshrl.u32 %v1639, 7
    %v1641 = vsub.s32 0, %v1640
    %v1642 = vrot.slane %v1060, %v1641
    %v1647 = vunpack.c.l.b16 %v1039
    %v1648 = vunpack.c.l.b16 %v1040
    %v1649 = vunpack.c.l.b16 %v1041
    %v1650 = vunpack.c.l.b16 %v1042
    %v1651 = vpack.c.b16 %v1648, %v1647
    %v1652 = vpack.c.b16 %v1650, %v1649
    %v1656 = vsel %vm181, %v1638, 0
    %1658 = vmatprep.subr.bf16.mxu0 0
    %1659 = vmatpush1.bf16.msra.mxu0 %v1651
    %1660 = vmatprep.subr.bf16.mxu0 0
    %1661 = vmatpush1.bf16.msra.mxu0 %v1652
    %1662 = vmatprep.subr.bf16.mxu0 0
    %1663 = vmatpush1.bf16.msra.mxu0 0
    %1664 = vmatprep.subr.bf16.mxu0 0
    %1665 = vmatpush1.bf16.msra.mxu0 0
    %1666 = vmatprep.subr.bf16.mxu0 0
    %1667 = vmatpush1.bf16.msra.mxu0 0
    %1668 = vmatprep.subr.bf16.mxu0 0
    %1669 = vmatpush1.bf16.msra.mxu0 0
    %1670 = vmatprep.subr.bf16.mxu0 0
    %1671 = vmatpush1.bf16.msra.mxu0 0
    %1672 = vmatprep.subr.bf16.mxu0 0
    %1673 = vmatpush1.bf16.msra.mxu0 0
    %1674 = vmatprep.subr.bf16.mxu0 0
    %1675 = vmatpush1.bf16.msra.mxu0 0
    %1676 = vmatprep.subr.bf16.mxu0 0
    %1677 = vmatpush1.bf16.msra.mxu0 0
    %1678 = vmatprep.subr.bf16.mxu0 0
    %1679 = vmatpush1.bf16.msra.mxu0 0
    %1680 = vmatprep.subr.bf16.mxu0 0
    %1681 = vmatpush1.bf16.msra.mxu0 0
    %1682 = vmatprep.subr.bf16.mxu0 0
    %1683 = vmatpush1.bf16.msra.mxu0 0
    %1684 = vmatprep.subr.bf16.mxu0 0
    %1685 = vmatpush1.bf16.msra.mxu0 0
    %1686 = vmatprep.subr.bf16.mxu0 0
    %1687 = vmatpush1.bf16.msra.mxu0 0
    %1688 = vmatprep.subr.bf16.mxu0 0
    %1689 = vmatpush1.bf16.msra.mxu0 0
    %1690 = vmatprep.mubr.bf16.mxu0 0
    %1691 = vmatmul.mubr.bf16.gmra.mrb[0].mxu0 %v1656
    %v1692 = vpop.f32.mrb[0].mxu0
    %v1693 = vadd.f32 %v1642, %v1692
    %v1694 = vpop.f32.mrb[0].mxu0
    %v1695 = vpop.f32.mrb[0].mxu0
    %v1696 = vadd.f32 %v1642, %v1695
    %v1697 = vpop.f32.mrb[0].mxu0
    %1698 = vdwg.mxu0
    %v1699 = vadd.f32 %v1029, %v1693
    %v1700 = vadd.f32 %v1030, %v1696
    %v1701 = vsel %vm181, %v1699, 0.0
    %1702 = vadd.xlane.f32.xlu0 %v1701
    %v1703 = vpop.xlane.xlu0 %1702
    %v1704 = vsel %vm181, %v1700, 0.0
    %1705 = vadd.xlane.f32.xlu0 %v1704
    %v1706 = vpop.xlane.xlu0 %1705
    %v1707 = vmul.f32 %v1703, %v812
    %v1708 = vmul.f32 %v1706, %v812
    %v1709 = vsub.f32 %v1699, %v1707
    %v1710 = vsub.f32 %v1700, %v1708
    %v1711 = vmul.f32 %v1709, %v1709
    %v1712 = vmul.f32 %v1710, %v1710
    %v1713 = vsel %vm181, %v1711, 0.0
    %1714 = vadd.xlane.f32.xlu0 %v1713
    %v1715 = vpop.xlane.xlu0 %1714
    %v1716 = vsel %vm181, %v1712, 0.0
    %1717 = vadd.xlane.f32.xlu0 %v1716
    %v1718 = vpop.xlane.xlu0 %1717
    %v1719 = vmul.f32 %v1715, %v812
    %v1720 = vmul.f32 %v1718, %v812
    %v1721 = vadd.f32 %v1719, 1e-05
    %v1722 = vadd.f32 %v1720, 1e-05
    %v1723 = vrsqrt.pop %v1721
    %v1724 = vrsqrt.pop %v1722
    %v1725 = vmul.f32 %v1709, %v1723
    %v1726 = vmul.f32 %v1710, %v1724
    %v1727 = vlaneseq
    %v1728 = vshrl.u32 %v1727, 7
    %v1729 = vsub.s32 1, %v1728
    %v1730 = vrot.slane %v1060, %v1729
    %v1731 = vmul.f32 %v1725, %v1730
    %v1732 = vmul.f32 %v1726, %v1730
    %v1733 = vlaneseq
    %v1734 = vshrl.u32 %v1733, 7
    %v1735 = vsub.s32 2, %v1734
    %v1736 = vrot.slane %v1060, %v1735
    %v1737 = vadd.f32 %v1731, %v1736
    %v1738 = vadd.f32 %v1732, %v1736
    %v1739 = vpack.c.bf16 %v1738, %v1737
    %v1741 = vlaneseq
    %v1742 = vshrl.u32 %v1741, 7
    %v1743 = vsub.s32 0, %v1742
    %v1744 = vrot.slane %v1049, %v1743
    %v1750 = vunpack.c.l.b16 %v1044
    %v1751 = vunpack.c.l.b16 %v1045
    %v1752 = vunpack.c.l.b16 %v1046
    %v1753 = vunpack.c.l.b16 %v1047
    %v1754 = vpack.c.b16 %v1751, %v1750
    %v1755 = vpack.c.b16 %v1753, %v1752
    %v1759 = vsel %vm181, %v1739, 0
    %1761 = vmatprep.subr.bf16.mxu0 0
    %1762 = vmatpush1.bf16.msra.mxu0 %v1754
    %1763 = vmatprep.subr.bf16.mxu0 0
    %1764 = vmatpush1.bf16.msra.mxu0 %v1755
    %1765 = vmatprep.subr.bf16.mxu0 0
    %1766 = vmatpush1.bf16.msra.mxu0 0
    %1767 = vmatprep.subr.bf16.mxu0 0
    %1768 = vmatpush1.bf16.msra.mxu0 0
    %1769 = vmatprep.subr.bf16.mxu0 0
    %1770 = vmatpush1.bf16.msra.mxu0 0
    %1771 = vmatprep.subr.bf16.mxu0 0
    %1772 = vmatpush1.bf16.msra.mxu0 0
    %1773 = vmatprep.subr.bf16.mxu0 0
    %1774 = vmatpush1.bf16.msra.mxu0 0
    %1775 = vmatprep.subr.bf16.mxu0 0
    %1776 = vmatpush1.bf16.msra.mxu0 0
    %1777 = vmatprep.subr.bf16.mxu0 0
    %1778 = vmatpush1.bf16.msra.mxu0 0
    %1779 = vmatprep.subr.bf16.mxu0 0
    %1780 = vmatpush1.bf16.msra.mxu0 0
    %1781 = vmatprep.subr.bf16.mxu0 0
    %1782 = vmatpush1.bf16.msra.mxu0 0
    %1783 = vmatprep.subr.bf16.mxu0 0
    %1784 = vmatpush1.bf16.msra.mxu0 0
    %1785 = vmatprep.subr.bf16.mxu0 0
    %1786 = vmatpush1.bf16.msra.mxu0 0
    %1787 = vmatprep.subr.bf16.mxu0 0
    %1788 = vmatpush1.bf16.msra.mxu0 0
    %1789 = vmatprep.subr.bf16.mxu0 0
    %1790 = vmatpush1.bf16.msra.mxu0 0
    %1791 = vmatprep.subr.bf16.mxu0 0
    %1792 = vmatpush1.bf16.msra.mxu0 0
    %1793 = vmatprep.mubr.bf16.mxu0 0
    %1794 = vmatmul.mubr.bf16.gmra.mrb[0].mxu0 %v1759
    %v1795 = vpop.f32.mrb[0].mxu0
    %v1796 = vadd.f32 %v1744, %v1795
    %v1797 = vpop.f32.mrb[0].mxu0
    %v1798 = vpop.f32.mrb[0].mxu0
    %v1799 = vadd.f32 %v1744, %v1798
    %v1800 = vpop.f32.mrb[0].mxu0
    %1801 = vdwg.mxu0
    %v1802 = vmul.f32 %v1796, 0.5
    %v1803 = vmul.f32 %v1799, 0.5
    %v1804 = vmul.f32 %v1796, 0.70710677
    %v1805 = vmul.f32 %v1799, 0.70710677
    %v1806 = verf.f32.pop %v1804
    %v1807 = verf.f32.pop %v1805
    %v1808 = vadd.f32 %v1806, 1.0
    %v1809 = vadd.f32 %v1807, 1.0
    %v1810 = vmul.f32 %v1802, %v1808
    %v1811 = vmul.f32 %v1803, %v1809
    %v1812 = vpack.c.bf16 %v1811, %v1810
    %v1813 = vlaneseq
    %v1814 = vshrl.u32 %v1813, 7
    %v1815 = vsub.s32 5, %v1814
    %v1816 = vrot.slane %v1060, %v1815
    %v1825 = vunpack.c.l.b16 %v1051
    %v1826 = vunpack.c.l.b16 %v1052
    %v1827 = vunpack.c.l.b16 %v1053
    %v1828 = vunpack.c.l.b16 %v1054
    %v1829 = vunpack.c.l.b16 %v1055
    %v1830 = vunpack.c.l.b16 %v1056
    %v1831 = vunpack.c.l.b16 %v1057
    %v1832 = vunpack.c.l.b16 %v1058
    %v1833 = vpack.c.b16 %v1826, %v1825
    %v1834 = vpack.c.b16 %v1828, %v1827
    %v1835 = vpack.c.b16 %v1830, %v1829
    %v1836 = vpack.c.b16 %v1832, %v1831
    %v1842 = vsel %vm92, %v1812, 0
    %1844 = vmatprep.subr.bf16.mxu0 0
    %1845 = vmatpush1.bf16.msra.mxu0 %v1833
    %1846 = vmatprep.subr.bf16.mxu0 0
    %1847 = vmatpush1.bf16.msra.mxu0 %v1834
    %1848 = vmatprep.subr.bf16.mxu0 0
    %1849 = vmatpush1.bf16.msra.mxu0 %v1835
    %1850 = vmatprep.subr.bf16.mxu0 0
    %1851 = vmatpush1.bf16.msra.mxu0 %v1836
    %1852 = vmatprep.subr.bf16.mxu0 0
    %1853 = vmatpush1.bf16.msra.mxu0 0
    %1854 = vmatprep.subr.bf16.mxu0 0
    %1855 = vmatpush1.bf16.msra.mxu0 0
    %1856 = vmatprep.subr.bf16.mxu0 0
    %1857 = vmatpush1.bf16.msra.mxu0 0
    %1858 = vmatprep.subr.bf16.mxu0 0
    %1859 = vmatpush1.bf16.msra.mxu0 0
    %1860 = vmatprep.subr.bf16.mxu0 0
    %1861 = vmatpush1.bf16.msra.mxu0 0
    %1862 = vmatprep.subr.bf16.mxu0 0
    %1863 = vmatpush1.bf16.msra.mxu0 0
    %1864 = vmatprep.subr.bf16.mxu0 0
    %1865 = vmatpush1.bf16.msra.mxu0 0
    %1866 = vmatprep.subr.bf16.mxu0 0
    %1867 = vmatpush1.bf16.msra.mxu0 0
    %1868 = vmatprep.subr.bf16.mxu0 0
    %1869 = vmatpush1.bf16.msra.mxu0 0
    %1870 = vmatprep.subr.bf16.mxu0 0
    %1871 = vmatpush1.bf16.msra.mxu0 0
    %1872 = vmatprep.subr.bf16.mxu0 0
    %1873 = vmatpush1.bf16.msra.mxu0 0
    %1874 = vmatprep.subr.bf16.mxu0 0
    %1875 = vmatpush1.bf16.msra.mxu0 0
    %1876 = vmatprep.mubr.bf16.mxu0 0
    %1877 = vmatmul.mubr.bf16.gmra.mrb[0].mxu0 %v1842
    %v1878 = vpop.f32.mrb[0].mxu0
    %v1879 = vadd.f32 %v1816, %v1878
    %v1880 = vpop.f32.mrb[0].mxu0
    %v1881 = vpop.f32.mrb[0].mxu0
    %v1882 = vadd.f32 %v1816, %v1881
    %v1883 = vpop.f32.mrb[0].mxu0
    %1884 = vdwg.mxu0
    %v1885 = vadd.f32 %v1737, %v1879
    %v1886 = vadd.f32 %v1738, %v1882
    %v1887 = vsel %vm181, %v1885, 0.0
    %1888 = vadd.xlane.f32.xlu0 %v1887
    %v1889 = vpop.xlane.xlu0 %1888
    %v1890 = vsel %vm181, %v1886, 0.0
    %1891 = vadd.xlane.f32.xlu0 %v1890
    %v1892 = vpop.xlane.xlu0 %1891
    %v1893 = vmul.f32 %v1889, %v812
    %v1894 = vmul.f32 %v1892, %v812
    %v1895 = vsub.f32 %v1885, %v1893
    %v1896 = vsub.f32 %v1886, %v1894
    %v1897 = vmul.f32 %v1895, %v1895
    %v1898 = vmul.f32 %v1896, %v1896
    %v1899 = vsel %vm181, %v1897, 0.0
    %1900 = vadd.xlane.f32.xlu0 %v1899
    %v1901 = vpop.xlane.xlu0 %1900
    %v1902 = vsel %vm181, %v1898, 0.0
    %1903 = vadd.xlane.f32.xlu0 %v1902
    %v1904 = vpop.xlane.xlu0 %1903
    %v1905 = vmul.f32 %v1901, %v812
    %v1906 = vmul.f32 %v1904, %v812
    %v1907 = vadd.f32 %v1905, 1e-05
    %v1908 = vadd.f32 %v1906, 1e-05
    %v1909 = vrsqrt.pop %v1907
    %v1910 = vrsqrt.pop %v1908
    %v1911 = vmul.f32 %v1895, %v1909
    %v1912 = vmul.f32 %v1896, %v1910
    %v1913 = vlaneseq
    %v1914 = vshrl.u32 %v1913, 7
    %v1915 = vsub.s32 3, %v1914
    %v1916 = vrot.slane %v1060, %v1915
    %v1917 = vmul.f32 %v1911, %v1916
    %v1918 = vmul.f32 %v1912, %v1916
    %v1919 = vlaneseq
    %v1920 = vshrl.u32 %v1919, 7
    %v1921 = vsub.s32 4, %v1920
    %v1922 = vrot.slane %v1060, %v1921
    %v1923 = vadd.f32 %v1917, %v1922
    %v1924 = vadd.f32 %v1918, %v1922
    %v1925 = vpack.c.bf16 %v1924, %v1923
    %v1926 = vld [vmem:[%s11] sm:$0xf]
    %v1927 = vld [vmem:[%s11 + $0x4] sm:$0xf]
    %v1928 = vld [vmem:[%s11 + $0x8] sm:$0xf]
    %v1929 = vld [vmem:[%s11 + $0xc] sm:$0xf]
    %v1934 = vunpack.c.l.b16 %v1926
    %v1935 = vunpack.c.l.b16 %v1927
    %v1936 = vunpack.c.l.b16 %v1928
    %v1937 = vunpack.c.l.b16 %v1929
    %v1938 = vpack.c.b16 %v1935, %v1934
    %v1939 = vpack.c.b16 %v1937, %v1936
    %v1943 = vsel %vm181, %v1925, 0
    %1945 = vmatprep.subr.bf16.mxu0 0
    %1946 = vmatpush1.bf16.msra.mxu0 %v1938
    %1947 = vmatprep.subr.bf16.mxu0 0
    %1948 = vmatpush1.bf16.msra.mxu0 %v1939
    %1949 = vmatprep.subr.bf16.mxu0 0
    %1950 = vmatpush1.bf16.msra.mxu0 0
    %1951 = vmatprep.subr.bf16.mxu0 0
    %1952 = vmatpush1.bf16.msra.mxu0 0
    %1953 = vmatprep.subr.bf16.mxu0 0
    %1954 = vmatpush1.bf16.msra.mxu0 0
    %1955 = vmatprep.subr.bf16.mxu0 0
    %1956 = vmatpush1.bf16.msra.mxu0 0
    %1957 = vmatprep.subr.bf16.mxu0 0
    %1958 = vmatpush1.bf16.msra.mxu0 0
    %1959 = vmatprep.subr.bf16.mxu0 0
    %1960 = vmatpush1.bf16.msra.mxu0 0
    %1961 = vmatprep.subr.bf16.mxu0 0
    %1962 = vmatpush1.bf16.msra.mxu0 0
    %1963 = vmatprep.subr.bf16.mxu0 0
    %1964 = vmatpush1.bf16.msra.mxu0 0
    %1965 = vmatprep.subr.bf16.mxu0 0
    %1966 = vmatpush1.bf16.msra.mxu0 0
    %1967 = vmatprep.subr.bf16.mxu0 0
    %1968 = vmatpush1.bf16.msra.mxu0 0
    %1969 = vmatprep.subr.bf16.mxu0 0
    %1970 = vmatpush1.bf16.msra.mxu0 0
    %1971 = vmatprep.subr.bf16.mxu0 0
    %1972 = vmatpush1.bf16.msra.mxu0 0
    %1973 = vmatprep.subr.bf16.mxu0 0
    %1974 = vmatpush1.bf16.msra.mxu0 0
    %1975 = vmatprep.subr.bf16.mxu0 0
    %1976 = vmatpush1.bf16.msra.mxu0 0
    %1977 = vmatprep.mubr.bf16.mxu0 0
    %1978 = vmatmul.mubr.bf16.gmra.mrb[0].mxu0 %v1943
    %v1979 = vpop.f32.mrb[0].mxu0
    %v1980 = vadd.f32 0.0, %v1979
    %v1981 = vpop.f32.mrb[0].mxu0
    %v1982 = vpop.f32.mrb[0].mxu0
    %v1983 = vadd.f32 0.0, %v1982
    %v1984 = vpop.f32.mrb[0].mxu0
    %1985 = vdwg.mxu0
    %1986 = vst [vmem:[#allocation2] sm:$0xff] %v1980
    %1987 = vst [vmem:[#allocation2 + $0x8] sm:$0xff] %v1983
    // Predicated region
    $region50: #{osu_transformer_lm_forward.1} parent=1 // pred_check
      _
    $region51: #{osu_transformer_lm_forward.1} parent=1 // pred_check_branch
      %1989 = sbr.rel (0) target = $region53
    $region52: #{osu_transformer_lm_forward.1} parent=1 // pred_region
      %s1991 = ssub.s32 256, 256
      %1992 = vsyncadd [#allocation3], %s1991
      %s1993 = sshll.u32 [#allocation2], 4
      %s1994 = int_to_ptr.vmem [resolvable:$true] %s1993
      %1999 = dma.vmem_to_hbm [thread:$0]  %s1994, 256, %s12, [#allocation3], 128, 128, 8
    $region53: #{osu_transformer_lm_forward.1} parent=1 // pred_fallthru
      _
    // Predicated region
    $region54: #{osu_transformer_lm_forward.1} parent=1 // pred_check
      _
    $region55: #{osu_transformer_lm_forward.1} parent=1 // pred_check_branch
      %2001 = sbr.rel (0) target = $region57
    $region56: #{osu_transformer_lm_forward.1} parent=1 // pred_region
      %2002 = dma.done [#allocation3], 256
    $region57: #{osu_transformer_lm_forward.1} parent=1 // pred_fallthru
      _
    %2003 = vsyncpa [#allocation3], 1

</llo_original>
